<compile_context>
chip_gen: v5e
topology: v5e:2x2
jax: 0.10.0
libtpu: 0.0.40
codegen_flags: <defaults>
</compile_context>

<pallas_src>
import functools

import numpy as np
import jax
import jax.numpy as jnp
from jax import lax
from jax.experimental import pallas as pl
from jax.experimental.pallas import tpu as pltpu


def _round_up(v, m):
    return -(-v // m) * m


# --------------------------------------------------------------------------------------
# Pass 1: fused (bottleneck ∘ transpose-convs) + 1x1 conv + MaxUnpool, per (n, L-tile).
# --------------------------------------------------------------------------------------
def _conv_unpool_kernel(x_ref, idxl_ref, idxm_ref, idxr_ref, w_ref, s_ref, psum_ref,
                        *, oc, oc8, tl, k_max, length):
    t = pl.program_id(1)
    base = pl.multiple_of(t * tl, 128)
    pad_max = (k_max - 1) // 2

    # im2col slab over this tile's halo'd window of the (whole, resident) padded x row.
    # Row order = (tap j, channel c); lane width is exactly tl (128-multiple, unmasked).
    xw = x_ref[:, pl.ds(base, tl + 2 * pad_max)]                           # (c_pad, tl+2p)
    slab = jnp.concatenate([xw[:, j:j + tl] for j in range(k_max)], axis=0)  # (k_max*c_pad, tl)

    # ONE MXU matmul produces, as row groups:
    #   [0, oc)           bottleneck(concat(Z1, Z2, Z3))   (pre-BN)
    #   [oc8,   +oc)      Z4 at tap pad_max-1  -> z4[j-1]
    #   [2*oc8, +oc)      Z4 at tap pad_max    -> z4[j]
    #   [3*oc8, +oc)      Z4 at tap pad_max+1  -> z4[j+1]
    res = jnp.dot(w_ref[...], slab, preferred_element_type=jnp.float32)    # (4*oc8, tl) f32
    bn_pre = res[:oc, :]
    z4_m1 = res[oc8:oc8 + oc, :]
    z4_c = res[2 * oc8:2 * oc8 + oc, :]
    z4_p1 = res[3 * oc8:3 * oc8 + oc, :]

    # MaxUnpool1d(3,1,1): out[j] = z4[l] where idx[l] == j, l in {j-1, j, j+1}.
    # PyTorch's scatter loops l ascending => last write wins => priority l=j+1 > j > j-1.
    # Halo columns come from the 128-wide neighbour blocks; signal edges are masked by jg.
    idx_c = idxm_ref[...]                                                  # (oc, tl) int32
    idx_m1 = jnp.concatenate([idxl_ref[:, 127:128], idx_c[:, :tl - 1]], axis=1)
    idx_p1 = jnp.concatenate([idx_c[:, 1:], idxr_ref[:, 0:1]], axis=1)
    jg = base + lax.broadcasted_iota(jnp.int32, (oc, tl), 1)
    mup = jnp.where((idx_p1 == jg) & (jg < length - 1), z4_p1,
          jnp.where(idx_c == jg, z4_c,
          jnp.where((idx_m1 == jg) & (jg > 0), z4_m1, 0.0)))

    s = bn_pre + mup                                                       # (oc, tl) f32
    s_ref[...] = s.astype(s_ref.dtype)

    # Per-channel (sum, sum^2) accumulated across the L-tile ("arbitrary") axis; the
    # (oc, 2) block stays VMEM-resident and is DMA'd out once per batch index.
    @pl.when(t == 0)
    def _():
        psum_ref[...] = jnp.zeros_like(psum_ref)
    psum_ref[...] += jnp.concatenate(
        [jnp.sum(s, axis=1, keepdims=True), jnp.sum(s * s, axis=1, keepdims=True)], axis=1)


# --------------------------------------------------------------------------------------
# Pass 2: y = relu(s * scale + shift), elementwise per (n, L-tile).
# --------------------------------------------------------------------------------------
def _bn_relu_kernel(s_ref, scale_ref, shift_ref, o_ref):
    o_ref[...] = jnp.maximum(
        s_ref[...].astype(jnp.float32) * scale_ref[...] + shift_ref[...], 0.0)


@functools.partial(jax.jit, static_argnames=("kernel_sizes", "tile_l", "eps"))
def inception_module_transpose(x, indices, params, kernel_sizes=(9, 19, 39),
                               tile_l=None, eps=1e-5):
    """Forward pass of InceptionModuleTranspose.

    x:       (N, C_in, L) float32,  L a multiple of 128.
    indices: (N, out_channels, L) int32 — MaxPool1d(kernel=3, stride=1, padding=1) indices
             from the paired encoder (each index must lie in {j-1, j, j+1}).
    params:  (wt1, wt2, wt3, wm, wb, gamma, beta) with PyTorch shapes
             (C_in,B,k1), (C_in,B,k2), (C_in,B,k3), (OC,C_in,1), (OC,3B,1), (OC,), (OC,).
    All convs are bias=False (as in the module); BatchNorm uses training-mode batch stats.
    """
    wt1, wt2, wt3, wm, wb, gamma, beta = params
    n, c_in, length = x.shape
    b = wt1.shape[1]
    oc = wm.shape[0]
    ks = tuple(kernel_sizes)
    k_max = max(ks)
    pad_max = (k_max - 1) // 2
    assert k_max >= 3 and all(k % 2 == 1 for k in ks)
    assert length % 128 == 0, "L must be a multiple of 128"

    c_pad = _round_up(c_in, 8)            # f32 sublane-aligned im2col channel rows
    oc8 = _round_up(oc, 8)
    rows = 4 * oc8
    kc = k_max * c_pad
    lp = length + 2 * pad_max

    # ---- lane-dense L tile: big (1024/512) to amortise per-step cost, VMEM-capped ----
    if tile_l is None:
        tile_l = next((c for c in (1024, 512, 256, 128)
                       if length % c == 0 and 4 * kc * c <= (8 << 20)), 128)
    assert length % tile_l == 0 and tile_l % 128 == 0
    tl = tile_l
    num_lt = length // tl
    r = tl // 128
    nlb = length // 128

    # ---- fold weights:  bottleneck ∘ (transpose convs),  and conv_to_maxpool at 3 taps ----
    hi = lax.Precision.HIGHEST

    def branch_taps(wt, k):
        p = (k - 1) // 2
        off = pad_max - p
        wconv = jnp.flip(jnp.transpose(wt, (1, 0, 2)), axis=2)             # plain-conv (B,C,k)
        wconv = jnp.pad(wconv, ((0, 0), (0, c_pad - c_in), (off, k_max - k - off)))
        return jnp.transpose(wconv, (0, 2, 1)).reshape(b, kc)              # row = tap*c_pad + c

    wz = jnp.concatenate([branch_taps(w, k) for w, k in zip((wt1, wt2, wt3), ks)], axis=0)
    w_bn = jnp.dot(wb.reshape(oc, 3 * b), wz, precision=hi)                # (OC, K*C_pad)
    wm2 = wm.reshape(oc, c_in)
    w_all = jnp.zeros((rows, kc), jnp.float32).at[:oc].set(w_bn)
    for g, tap in ((1, pad_max - 1), (2, pad_max), (3, pad_max + 1)):      # z4[j-1], z4[j], z4[j+1]
        w_all = w_all.at[g * oc8:g * oc8 + oc, tap * c_pad:tap * c_pad + c_in].set(wm2)

    # ---- inputs: x gets a small zero pad (conv halo); indices are read in place ----
    x_p = jnp.pad(x.astype(jnp.float32), ((0, 0), (0, c_pad - c_in), (pad_max, pad_max)))
    idx = indices.astype(jnp.int32)

    vmem1 = (8 * (c_pad * lp + oc * (tl + 256) + rows * kc + 2 * oc)
             + 4 * oc * tl + 4 * (kc + rows + 16 * oc) * tl)
    cp1 = pltpu.CompilerParams(
        dimension_semantics=("parallel", "arbitrary"),
        vmem_limit_bytes=int(min(max(2 * vmem1, 16 << 20), 48 << 20)))

    kern1 = functools.partial(_conv_unpool_kernel, oc=oc, oc8=oc8, tl=tl,
                              k_max=k_max, length=length)
    s, psum = pl.pallas_call(
        kern1,
        grid=(n, num_lt),
        in_specs=[
            pl.BlockSpec((None, c_pad, lp), lambda i, t: (i, 0, 0)),       # whole padded x row
            pl.BlockSpec((None, oc, 128),                                  # left idx halo block
                         lambda i, t: (i, 0, jnp.maximum(t * r - 1, 0))),
            pl.BlockSpec((None, oc, tl), lambda i, t: (i, 0, t)),          # main idx tile
            pl.BlockSpec((None, oc, 128),                                  # right idx halo block
                         lambda i, t: (i, 0, jnp.minimum((t + 1) * r, nlb - 1))),
            pl.BlockSpec((rows, kc), lambda i, t: (0, 0)),                 # fused weights
        ],
        out_specs=(
            pl.BlockSpec((None, oc, tl), lambda i, t: (i, 0, t)),
            pl.BlockSpec((None, oc, 2), lambda i, t: (i, 0, 0)),           # per-batch accumulator
        ),
        out_shape=(
            jax.ShapeDtypeStruct((n, oc, length), jnp.bfloat16),           # pre-BN intermediate
            jax.ShapeDtypeStruct((n, oc, 2), jnp.float32),                 # (sum, sumsq) per n
        ),
        compiler_params=cp1,
    )(x_p, idx, idx, idx, w_all)

    # ---- tiny cross-batch reduction + fold BatchNorm into per-channel scale/shift ----
    # TODO(synk): E[x^2]-E[x]^2 in f32 can cancel for very large N*L with |mean| >> std.
    sums = jnp.sum(psum, axis=0)                       # (OC, 2)
    cnt = float(n * length)
    mean = sums[:, 0] / cnt
    var = jnp.maximum(sums[:, 1] / cnt - mean * mean, 0.0)   # biased variance (training mode)
    inv = lax.rsqrt(var + eps)
    g32 = gamma.astype(jnp.float32)
    scale = (g32 * inv).reshape(oc, 1)
    shift = (beta.astype(jnp.float32) - mean * g32 * inv).reshape(oc, 1)

    # ---- pass 2: HBM-bound elementwise BN+ReLU sweep with large lane-dense blocks ----
    tile2 = next((c for c in (16384, 8192, 4096, 2048, 1024, 512, 256, 128)
                  if length % c == 0 and 12 * oc * c <= (24 << 20)), 128)
    cp2 = pltpu.CompilerParams(
        dimension_semantics=("parallel", "parallel"),
        vmem_limit_bytes=int(min(max(24 * oc * tile2, 16 << 20), 48 << 20)))
    out = pl.pallas_call(
        _bn_relu_kernel,
        grid=(n, length // tile2),
        in_specs=[
            pl.BlockSpec((None, oc, tile2), lambda i, t: (i, 0, t)),
            pl.BlockSpec((oc, 1), lambda i, t: (0, 0)),
            pl.BlockSpec((oc, 1), lambda i, t: (0, 0)),
        ],
        out_specs=pl.BlockSpec((None, oc, tile2), lambda i, t: (i, 0, t)),
        out_shape=jax.ShapeDtypeStruct((n, oc, length), jnp.float32),
        compiler_params=cp2,
    )(s, scale, shift)
    return out


# --------------------------------------------------------------------------------------
# Pure-JAX mirror of the PyTorch forward (numerical cross-check).
# --------------------------------------------------------------------------------------
def _reference_forward(x, indices, params, kernel_sizes, eps=1e-5):
    wt1, wt2, wt3, wm, wb, gamma, beta = params
    n, c_in, length = x.shape
    oc = wm.shape[0]
    hi = lax.Precision.HIGHEST

    def tconv(wt, k):
        p = (k - 1) // 2
        w = jnp.flip(jnp.transpose(wt, (1, 0, 2)), axis=2)            # plain-conv (B, C_in, k)
        xp = jnp.pad(x, ((0, 0), (0, 0), (p, p)))
        cols = jnp.stack([xp[:, :, j:j + length] for j in range(k)], axis=-1)  # (N,C,L,k)
        return jnp.einsum('bck,nclk->nbl', w, cols, precision=hi)

    z = jnp.concatenate([tconv(w, k) for w, k in zip((wt1, wt2, wt3), kernel_sizes)], axis=1)
    z4 = jnp.einsum('oc,ncl->nol', wm.reshape(oc, c_in), x, precision=hi)
    bn_pre = jnp.einsum('ob,nbl->nol', wb.reshape(oc, -1), z, precision=hi)

    # MaxUnpool1d(3,1,1): last-write-wins scatter (PyTorch loops l ascending).
    l_iota = jnp.arange(length)[None, None, :, None]
    j_iota = jnp.arange(length)[None, None, None, :]
    match = indices[..., :, None] == j_iota
    lstar = jnp.max(jnp.where(match, l_iota, -1), axis=2)
    mup = jnp.where(lstar >= 0,
                    jnp.take_along_axis(z4, jnp.maximum(lstar, 0), axis=2), 0.0)

    s = bn_pre + mup
    mean = jnp.mean(s, axis=(0, 2), keepdims=True)
    var = jnp.mean((s - mean) ** 2, axis=(0, 2), keepdims=True)
    out = (s - mean) * lax.rsqrt(var + eps) * gamma[None, :, None] + beta[None, :, None]
    return jnp.maximum(out, 0.0)


if __name__ == "__main__":
    N, C_IN, OC, B, L = 2, 4, 8, 32, 256
    KS = (9, 19, 39)

    key = jax.random.PRNGKey(0)
    kk = jax.random.split(key, 8)
    # Deterministic synthetic parameters (shapes match the PyTorch module __init__).
    wt1 = jax.random.normal(kk[0], (C_IN, B, KS[0]), jnp.float32) * 0.05   # ConvTranspose1d
    wt2 = jax.random.normal(kk[1], (C_IN, B, KS[1]), jnp.float32) * 0.05
    wt3 = jax.random.normal(kk[2], (C_IN, B, KS[2]), jnp.float32) * 0.05
    wm = jax.random.normal(kk[3], (OC, C_IN, 1), jnp.float32) * 0.05       # conv_to_maxpool
    wb = jax.random.normal(kk[4], (OC, 3 * B, 1), jnp.float32) * 0.05      # bottleneck
    gamma = jnp.ones((OC,), jnp.float32)                                   # BatchNorm weight
    beta = jnp.zeros((OC,), jnp.float32)                                   # BatchNorm bias
    x = jax.random.normal(kk[5], (N, C_IN, L), jnp.float32)

    # Valid MaxPool1d(kernel=3, stride=1, padding=1) indices, exactly as the paired
    # encoder would return them.
    src = np.asarray(jax.random.normal(kk[6], (N, OC, L), jnp.float32))
    padded = np.pad(src, ((0, 0), (0, 0), (1, 1)), constant_values=-np.inf)
    windows = np.stack([padded[:, :, i:i + L] for i in range(3)], axis=-1)
    indices = jnp.asarray((np.arange(L)[None, None, :] - 1
                           + np.argmax(windows, axis=-1)).astype(np.int32))

    params = (wt1, wt2, wt3, wm, wb, gamma, beta)
    out = inception_module_transpose(x, indices, params, kernel_sizes=KS)
    out = jax.block_until_ready(out)

    assert out.shape == (N, OC, L)
    assert bool(jnp.all(jnp.isfinite(out)))
    assert bool(jnp.all(out >= 0.0))          # ReLU output

    ref = _reference_forward(x, indices, params, KS)
    err = float(jnp.max(jnp.abs(out - ref)))
    assert err < 5e-2, f"max abs err {err}"

    print("KERNEL_OK")
</pallas_src>

<mosaic_0001>
module attributes {stable_mosaic.version = 11 : i64} {
  func.func @_conv_unpool_kernel(%arg0: i32, %arg1: i32, %arg2: memref<1x8x294xf32, #tpu.memory_space<vmem>>, %arg3: memref<1x8x128xi32, #tpu.memory_space<vmem>>, %arg4: memref<1x8x256xi32, #tpu.memory_space<vmem>>, %arg5: memref<1x8x128xi32, #tpu.memory_space<vmem>>, %arg6: memref<32x312xf32, #tpu.memory_space<vmem>>, %arg7: memref<1x8x256xbf16, #tpu.memory_space<vmem>>, %arg8: memref<1x8x2xf32, #tpu.memory_space<vmem>>) attributes {dimension_semantics = [#tpu.dimension_semantics<parallel>, #tpu.dimension_semantics<arbitrary>], iteration_bounds = array<i64: 2, 1>, scalar_prefetch = 0 : i64, scratch_operands = 0 : i64, tpu.core_type = #tpu.core_type<tc>, window_params = [{transform_indices = @transform_0, window_bounds = array<i64: 1, 8, 294>}, {transform_indices = @transform_1, window_bounds = array<i64: 1, 8, 128>}, {transform_indices = @transform_2, window_bounds = array<i64: 1, 8, 256>}, {transform_indices = @transform_3, window_bounds = array<i64: 1, 8, 128>}, {pipeline_mode = #tpu.pipeline_mode<synchronous>, transform_indices = @transform_4, window_bounds = array<i64: 32, 312>}, {transform_indices = @transform_5, window_bounds = array<i64: 1, 8, 256>}, {transform_indices = @transform_6, window_bounds = array<i64: 1, 8, 2>}]} {
    %c256_i32 = arith.constant 256 : i32
    %0 = arith.muli %arg1, %c256_i32 : i32
    %1 = tpu.assume_multiple %0, 128 : i32
    %c0 = arith.constant 0 : index
    %c0_0 = arith.constant 0 : index
    %2 = arith.index_cast %1 : i32 to index
    %3 = vector.load %arg2[%c0, %c0_0, %2] : memref<1x8x294xf32, #tpu.memory_space<vmem>>, vector<1x8x294xf32>
    %4 = vector.shape_cast %3 : vector<1x8x294xf32> to vector<8x294xf32>
    %5 = vector.extract_strided_slice %4 {offsets = [0, 0], sizes = [8, 256], strides = [1, 1]} : vector<8x294xf32> to vector<8x256xf32>
    %6 = vector.extract_strided_slice %4 {offsets = [0, 1], sizes = [8, 256], strides = [1, 1]} : vector<8x294xf32> to vector<8x256xf32>
    %7 = vector.extract_strided_slice %4 {offsets = [0, 2], sizes = [8, 256], strides = [1, 1]} : vector<8x294xf32> to vector<8x256xf32>
    %8 = vector.extract_strided_slice %4 {offsets = [0, 3], sizes = [8, 256], strides = [1, 1]} : vector<8x294xf32> to vector<8x256xf32>
    %9 = vector.extract_strided_slice %4 {offsets = [0, 4], sizes = [8, 256], strides = [1, 1]} : vector<8x294xf32> to vector<8x256xf32>
    %10 = vector.extract_strided_slice %4 {offsets = [0, 5], sizes = [8, 256], strides = [1, 1]} : vector<8x294xf32> to vector<8x256xf32>
    %11 = vector.extract_strided_slice %4 {offsets = [0, 6], sizes = [8, 256], strides = [1, 1]} : vector<8x294xf32> to vector<8x256xf32>
    %12 = vector.extract_strided_slice %4 {offsets = [0, 7], sizes = [8, 256], strides = [1, 1]} : vector<8x294xf32> to vector<8x256xf32>
    %13 = vector.extract_strided_slice %4 {offsets = [0, 8], sizes = [8, 256], strides = [1, 1]} : vector<8x294xf32> to vector<8x256xf32>
    %14 = vector.extract_strided_slice %4 {offsets = [0, 9], sizes = [8, 256], strides = [1, 1]} : vector<8x294xf32> to vector<8x256xf32>
    %15 = vector.extract_strided_slice %4 {offsets = [0, 10], sizes = [8, 256], strides = [1, 1]} : vector<8x294xf32> to vector<8x256xf32>
    %16 = vector.extract_strided_slice %4 {offsets = [0, 11], sizes = [8, 256], strides = [1, 1]} : vector<8x294xf32> to vector<8x256xf32>
    %17 = vector.extract_strided_slice %4 {offsets = [0, 12], sizes = [8, 256], strides = [1, 1]} : vector<8x294xf32> to vector<8x256xf32>
    %18 = vector.extract_strided_slice %4 {offsets = [0, 13], sizes = [8, 256], strides = [1, 1]} : vector<8x294xf32> to vector<8x256xf32>
    %19 = vector.extract_strided_slice %4 {offsets = [0, 14], sizes = [8, 256], strides = [1, 1]} : vector<8x294xf32> to vector<8x256xf32>
    %20 = vector.extract_strided_slice %4 {offsets = [0, 15], sizes = [8, 256], strides = [1, 1]} : vector<8x294xf32> to vector<8x256xf32>
    %21 = vector.extract_strided_slice %4 {offsets = [0, 16], sizes = [8, 256], strides = [1, 1]} : vector<8x294xf32> to vector<8x256xf32>
    %22 = vector.extract_strided_slice %4 {offsets = [0, 17], sizes = [8, 256], strides = [1, 1]} : vector<8x294xf32> to vector<8x256xf32>
    %23 = vector.extract_strided_slice %4 {offsets = [0, 18], sizes = [8, 256], strides = [1, 1]} : vector<8x294xf32> to vector<8x256xf32>
    %24 = vector.extract_strided_slice %4 {offsets = [0, 19], sizes = [8, 256], strides = [1, 1]} : vector<8x294xf32> to vector<8x256xf32>
    %25 = vector.extract_strided_slice %4 {offsets = [0, 20], sizes = [8, 256], strides = [1, 1]} : vector<8x294xf32> to vector<8x256xf32>
    %26 = vector.extract_strided_slice %4 {offsets = [0, 21], sizes = [8, 256], strides = [1, 1]} : vector<8x294xf32> to vector<8x256xf32>
    %27 = vector.extract_strided_slice %4 {offsets = [0, 22], sizes = [8, 256], strides = [1, 1]} : vector<8x294xf32> to vector<8x256xf32>
    %28 = vector.extract_strided_slice %4 {offsets = [0, 23], sizes = [8, 256], strides = [1, 1]} : vector<8x294xf32> to vector<8x256xf32>
    %29 = vector.extract_strided_slice %4 {offsets = [0, 24], sizes = [8, 256], strides = [1, 1]} : vector<8x294xf32> to vector<8x256xf32>
    %30 = vector.extract_strided_slice %4 {offsets = [0, 25], sizes = [8, 256], strides = [1, 1]} : vector<8x294xf32> to vector<8x256xf32>
    %31 = vector.extract_strided_slice %4 {offsets = [0, 26], sizes = [8, 256], strides = [1, 1]} : vector<8x294xf32> to vector<8x256xf32>
    %32 = vector.extract_strided_slice %4 {offsets = [0, 27], sizes = [8, 256], strides = [1, 1]} : vector<8x294xf32> to vector<8x256xf32>
    %33 = vector.extract_strided_slice %4 {offsets = [0, 28], sizes = [8, 256], strides = [1, 1]} : vector<8x294xf32> to vector<8x256xf32>
    %34 = vector.extract_strided_slice %4 {offsets = [0, 29], sizes = [8, 256], strides = [1, 1]} : vector<8x294xf32> to vector<8x256xf32>
    %35 = vector.extract_strided_slice %4 {offsets = [0, 30], sizes = [8, 256], strides = [1, 1]} : vector<8x294xf32> to vector<8x256xf32>
    %36 = vector.extract_strided_slice %4 {offsets = [0, 31], sizes = [8, 256], strides = [1, 1]} : vector<8x294xf32> to vector<8x256xf32>
    %37 = vector.extract_strided_slice %4 {offsets = [0, 32], sizes = [8, 256], strides = [1, 1]} : vector<8x294xf32> to vector<8x256xf32>
    %38 = vector.extract_strided_slice %4 {offsets = [0, 33], sizes = [8, 256], strides = [1, 1]} : vector<8x294xf32> to vector<8x256xf32>
    %39 = vector.extract_strided_slice %4 {offsets = [0, 34], sizes = [8, 256], strides = [1, 1]} : vector<8x294xf32> to vector<8x256xf32>
    %40 = vector.extract_strided_slice %4 {offsets = [0, 35], sizes = [8, 256], strides = [1, 1]} : vector<8x294xf32> to vector<8x256xf32>
    %41 = vector.extract_strided_slice %4 {offsets = [0, 36], sizes = [8, 256], strides = [1, 1]} : vector<8x294xf32> to vector<8x256xf32>
    %42 = vector.extract_strided_slice %4 {offsets = [0, 37], sizes = [8, 256], strides = [1, 1]} : vector<8x294xf32> to vector<8x256xf32>
    %43 = vector.extract_strided_slice %4 {offsets = [0, 38], sizes = [8, 256], strides = [1, 1]} : vector<8x294xf32> to vector<8x256xf32>
    %44 = tpu.concatenate %5, %6, %7, %8, %9, %10, %11, %12, %13, %14, %15, %16, %17, %18, %19, %20 in 0 : vector<8x256xf32>, vector<8x256xf32>, vector<8x256xf32>, vector<8x256xf32>, vector<8x256xf32>, vector<8x256xf32>, vector<8x256xf32>, vector<8x256xf32>, vector<8x256xf32>, vector<8x256xf32>, vector<8x256xf32>, vector<8x256xf32>, vector<8x256xf32>, vector<8x256xf32>, vector<8x256xf32>, vector<8x256xf32> -> vector<128x256xf32>
    %45 = tpu.concatenate %21, %22, %23, %24, %25, %26, %27, %28, %29, %30, %31, %32, %33, %34, %35, %36 in 0 : vector<8x256xf32>, vector<8x256xf32>, vector<8x256xf32>, vector<8x256xf32>, vector<8x256xf32>, vector<8x256xf32>, vector<8x256xf32>, vector<8x256xf32>, vector<8x256xf32>, vector<8x256xf32>, vector<8x256xf32>, vector<8x256xf32>, vector<8x256xf32>, vector<8x256xf32>, vector<8x256xf32>, vector<8x256xf32> -> vector<128x256xf32>
    %46 = tpu.concatenate %37, %38, %39, %40, %41, %42, %43 in 0 : vector<8x256xf32>, vector<8x256xf32>, vector<8x256xf32>, vector<8x256xf32>, vector<8x256xf32>, vector<8x256xf32>, vector<8x256xf32> -> vector<56x256xf32>
    %47 = tpu.concatenate %44, %45, %46 in 0 : vector<128x256xf32>, vector<128x256xf32>, vector<56x256xf32> -> vector<312x256xf32>
    %c0_1 = arith.constant 0 : index
    %c0_2 = arith.constant 0 : index
    %48 = vector.load %arg6[%c0_1, %c0_2] : memref<32x312xf32, #tpu.memory_space<vmem>>, vector<32x312xf32>
    %cst = arith.constant dense<0.000000e+00> : vector<32x256xf32>
    %49 = tpu.matmul %48, %47, %cst {dimension_numbers = #tpu.dot_dimension_numbers<[1], [0], [0], [1], [0, 0, 1, 1], [], []>} : vector<32x312xf32>, vector<312x256xf32>, vector<32x256xf32> -> vector<32x256xf32>
    %50 = vector.extract_strided_slice %49 {offsets = [0, 0], sizes = [8, 256], strides = [1, 1]} : vector<32x256xf32> to vector<8x256xf32>
    %51 = vector.extract_strided_slice %49 {offsets = [8, 0], sizes = [8, 256], strides = [1, 1]} : vector<32x256xf32> to vector<8x256xf32>
    %52 = vector.extract_strided_slice %49 {offsets = [16, 0], sizes = [8, 256], strides = [1, 1]} : vector<32x256xf32> to vector<8x256xf32>
    %53 = vector.extract_strided_slice %49 {offsets = [24, 0], sizes = [8, 256], strides = [1, 1]} : vector<32x256xf32> to vector<8x256xf32>
    %c0_3 = arith.constant 0 : index
    %c0_4 = arith.constant 0 : index
    %c0_5 = arith.constant 0 : index
    %54 = vector.load %arg4[%c0_3, %c0_4, %c0_5] : memref<1x8x256xi32, #tpu.memory_space<vmem>>, vector<1x8x256xi32>
    %55 = vector.shape_cast %54 : vector<1x8x256xi32> to vector<8x256xi32>
    %c0_6 = arith.constant 0 : index
    %c0_7 = arith.constant 0 : index
    %c127 = arith.constant 127 : index
    %56 = vector.load %arg3[%c0_6, %c0_7, %c127] : memref<1x8x128xi32, #tpu.memory_space<vmem>>, vector<1x8x1xi32>
    %57 = vector.shape_cast %56 : vector<1x8x1xi32> to vector<8x1xi32>
    %58 = vector.extract_strided_slice %55 {offsets = [0, 0], sizes = [8, 255], strides = [1, 1]} : vector<8x256xi32> to vector<8x255xi32>
    %59 = tpu.concatenate %57, %58 in 1 : vector<8x1xi32>, vector<8x255xi32> -> vector<8x256xi32>
    %60 = vector.extract_strided_slice %55 {offsets = [0, 1], sizes = [8, 255], strides = [1, 1]} : vector<8x256xi32> to vector<8x255xi32>
    %c0_8 = arith.constant 0 : index
    %c0_9 = arith.constant 0 : index
    %c0_10 = arith.constant 0 : index
    %61 = vector.load %arg5[%c0_8, %c0_9, %c0_10] : memref<1x8x128xi32, #tpu.memory_space<vmem>>, vector<1x8x1xi32>
    %62 = vector.shape_cast %61 : vector<1x8x1xi32> to vector<8x1xi32>
    %63 = tpu.concatenate %60, %62 in 1 : vector<8x255xi32>, vector<8x1xi32> -> vector<8x256xi32>
    %64 = tpu.iota {dimensions = array<i32: 1>} : vector<8x256xi32>
    %65 = vector.broadcast %1 : i32 to vector<8x256xi32>
    %66 = arith.addi %65, %64 : vector<8x256xi32>
    %67 = arith.cmpi eq, %63, %66 : vector<8x256xi32>
    %c255_i32 = arith.constant 255 : i32
    %68 = vector.broadcast %c255_i32 : i32 to vector<8x256xi32>
    %69 = arith.cmpi slt, %66, %68 : vector<8x256xi32>
    %70 = arith.andi %67, %69 : vector<8x256xi1>
    %71 = arith.cmpi eq, %55, %66 : vector<8x256xi32>
    %72 = arith.cmpi eq, %59, %66 : vector<8x256xi32>
    %c0_i32 = arith.constant 0 : i32
    %73 = vector.broadcast %c0_i32 : i32 to vector<8x256xi32>
    %74 = arith.cmpi sgt, %66, %73 : vector<8x256xi32>
    %75 = arith.andi %72, %74 : vector<8x256xi1>
    %cst_11 = arith.constant 0.000000e+00 : f32
    %76 = vector.broadcast %cst_11 : f32 to vector<8x256xf32>
    %77 = arith.select %75, %51, %76 : vector<8x256xi1>, vector<8x256xf32>
    %78 = arith.select %71, %52, %77 : vector<8x256xi1>, vector<8x256xf32>
    %79 = arith.select %70, %53, %78 : vector<8x256xi1>, vector<8x256xf32>
    %80 = arith.addf %50, %79 : vector<8x256xf32>
    %81 = arith.truncf %80 : vector<8x256xf32> to vector<8x256xbf16>
    %c0_12 = arith.constant 0 : index
    %c0_13 = arith.constant 0 : index
    %c0_14 = arith.constant 0 : index
    %82 = vector.load %arg7[%c0_12, %c0_13, %c0_14] : memref<1x8x256xbf16, #tpu.memory_space<vmem>>, vector<1x8x256xbf16>
    %83 = vector.shape_cast %82 : vector<1x8x256xbf16> to vector<8x256xbf16>
    %84 = vector.shape_cast %81 : vector<8x256xbf16> to vector<1x8x256xbf16>
    tpu.vector_store %arg7[%c0_12, %c0_13, %c0_14], %84 {strides = array<i32>} : memref<1x8x256xbf16, #tpu.memory_space<vmem>>, vector<1x8x256xbf16>,
    %c0_i32_15 = arith.constant 0 : i32
    %85 = arith.cmpi eq, %arg1, %c0_i32_15 : i32
    %86 = arith.extui %85 : i1 to i32
    %c0_i32_16 = arith.constant 0 : i32
    %87 = arith.cmpi ne, %86, %c0_i32_16 : i32
    scf.if %87 {
      %cst_25 = arith.constant 0.000000e+00 : f32
      %100 = vector.broadcast %cst_25 : f32 to vector<8x2xf32>
      %c0_26 = arith.constant 0 : index
      %c0_27 = arith.constant 0 : index
      %c0_28 = arith.constant 0 : index
      %101 = vector.load %arg8[%c0_26, %c0_27, %c0_28] : memref<1x8x2xf32, #tpu.memory_space<vmem>>, vector<1x8x2xf32>
      %102 = vector.shape_cast %101 : vector<1x8x2xf32> to vector<8x2xf32>
      %103 = vector.shape_cast %100 : vector<8x2xf32> to vector<1x8x2xf32>
      tpu.vector_store %arg8[%c0_26, %c0_27, %c0_28], %103 {strides = array<i32>} : memref<1x8x2xf32, #tpu.memory_space<vmem>>, vector<1x8x2xf32>,
    } else {
    }
    %c0_17 = arith.constant 0 : index
    %c0_18 = arith.constant 0 : index
    %c0_19 = arith.constant 0 : index
    %88 = vector.load %arg8[%c0_17, %c0_18, %c0_19] : memref<1x8x2xf32, #tpu.memory_space<vmem>>, vector<1x8x2xf32>
    %89 = vector.shape_cast %88 : vector<1x8x2xf32> to vector<8x2xf32>
    %cst_20 = arith.constant dense<0.000000e+00> : vector<8xf32>
    %90 = vector.multi_reduction <add>, %80, %cst_20 [1] : vector<8x256xf32> to vector<8xf32>
    %91 = vector.shape_cast %90 : vector<8xf32> to vector<8x1xf32>
    %92 = arith.mulf %80, %80 : vector<8x256xf32>
    %cst_21 = arith.constant dense<0.000000e+00> : vector<8xf32>
    %93 = vector.multi_reduction <add>, %92, %cst_21 [1] : vector<8x256xf32> to vector<8xf32>
    %94 = vector.shape_cast %93 : vector<8xf32> to vector<8x1xf32>
    %95 = tpu.concatenate %91, %94 in 1 : vector<8x1xf32>, vector<8x1xf32> -> vector<8x2xf32>
    %96 = arith.addf %89, %95 : vector<8x2xf32>
    %c0_22 = arith.constant 0 : index
    %c0_23 = arith.constant 0 : index
    %c0_24 = arith.constant 0 : index
    %97 = vector.load %arg8[%c0_22, %c0_23, %c0_24] : memref<1x8x2xf32, #tpu.memory_space<vmem>>, vector<1x8x2xf32>
    %98 = vector.shape_cast %97 : vector<1x8x2xf32> to vector<8x2xf32>
    %99 = vector.shape_cast %96 : vector<8x2xf32> to vector<1x8x2xf32>
    tpu.vector_store %arg8[%c0_22, %c0_23, %c0_24], %99 {strides = array<i32>} : memref<1x8x2xf32, #tpu.memory_space<vmem>>, vector<1x8x2xf32>,
    return
  }
  func.func @transform_0(%arg0: i32, %arg1: i32) -> (i32, i32, i32) {
    %c0_i32 = arith.constant 0 : i32
    %c0_i32_0 = arith.constant 0 : i32
    %c0_i32_1 = arith.constant 0 : i32
    return %arg0, %c0_i32, %c0_i32_0 : i32, i32, i32
  }
  func.func @transform_1(%arg0: i32, %arg1: i32) -> (i32, i32, i32) {
    %c2_i32 = arith.constant 2 : i32
    %0 = arith.muli %arg1, %c2_i32 : i32
    %c1_i32 = arith.constant 1 : i32
    %1 = arith.subi %0, %c1_i32 : i32
    %c0_i32 = arith.constant 0 : i32
    %2 = arith.maxsi %1, %c0_i32 : i32
    %c0_i32_0 = arith.constant 0 : i32
    %c0_i32_1 = arith.constant 0 : i32
    return %arg0, %c0_i32_0, %2 : i32, i32, i32
  }
  func.func @transform_2(%arg0: i32, %arg1: i32) -> (i32, i32, i32) {
    %c0_i32 = arith.constant 0 : i32
    %c0_i32_0 = arith.constant 0 : i32
    return %arg0, %c0_i32, %arg1 : i32, i32, i32
  }
  func.func @transform_3(%arg0: i32, %arg1: i32) -> (i32, i32, i32) {
    %c1_i32 = arith.constant 1 : i32
    %0 = arith.addi %arg1, %c1_i32 : i32
    %c2_i32 = arith.constant 2 : i32
    %1 = arith.muli %0, %c2_i32 : i32
    %c1_i32_0 = arith.constant 1 : i32
    %2 = arith.minsi %1, %c1_i32_0 : i32
    %c0_i32 = arith.constant 0 : i32
    %c0_i32_1 = arith.constant 0 : i32
    return %arg0, %c0_i32, %2 : i32, i32, i32
  }
  func.func @transform_4(%arg0: i32, %arg1: i32) -> (i32, i32) {
    %c0_i32 = arith.constant 0 : i32
    %c0_i32_0 = arith.constant 0 : i32
    %c0_i32_1 = arith.constant 0 : i32
    return %c0_i32, %c0_i32_0 : i32, i32
  }
  func.func @transform_5(%arg0: i32, %arg1: i32) -> (i32, i32, i32) {
    %c0_i32 = arith.constant 0 : i32
    %c0_i32_0 = arith.constant 0 : i32
    return %arg0, %c0_i32, %arg1 : i32, i32, i32
  }
  func.func @transform_6(%arg0: i32, %arg1: i32) -> (i32, i32, i32) {
    %c0_i32 = arith.constant 0 : i32
    %c0_i32_0 = arith.constant 0 : i32
    %c0_i32_1 = arith.constant 0 : i32
    return %arg0, %c0_i32, %c0_i32_0 : i32, i32, i32
  }
}

module attributes {stable_mosaic.version = 11 : i64} {
  func.func @_bn_relu_kernel(%arg0: i32, %arg1: i32, %arg2: memref<1x8x256xbf16, #tpu.memory_space<vmem>>, %arg3: memref<8x1xf32, #tpu.memory_space<vmem>>, %arg4: memref<8x1xf32, #tpu.memory_space<vmem>>, %arg5: memref<1x8x256xf32, #tpu.memory_space<vmem>>) attributes {dimension_semantics = [#tpu.dimension_semantics<parallel>, #tpu.dimension_semantics<parallel>], iteration_bounds = array<i64: 2, 1>, scalar_prefetch = 0 : i64, scratch_operands = 0 : i64, tpu.core_type = #tpu.core_type<tc>, window_params = [{transform_indices = @transform_0, window_bounds = array<i64: 1, 8, 256>}, {pipeline_mode = #tpu.pipeline_mode<synchronous>, transform_indices = @transform_1, window_bounds = array<i64: 8, 1>}, {pipeline_mode = #tpu.pipeline_mode<synchronous>, transform_indices = @transform_2, window_bounds = array<i64: 8, 1>}, {transform_indices = @transform_3, window_bounds = array<i64: 1, 8, 256>}]} {
    %c0 = arith.constant 0 : index
    %c0_0 = arith.constant 0 : index
    %c0_1 = arith.constant 0 : index
    %0 = vector.load %arg2[%c0, %c0_0, %c0_1] : memref<1x8x256xbf16, #tpu.memory_space<vmem>>, vector<1x8x256xbf16>
    %1 = vector.shape_cast %0 : vector<1x8x256xbf16> to vector<8x256xbf16>
    %2 = arith.extf %1 : vector<8x256xbf16> to vector<8x256xf32>
    %c0_2 = arith.constant 0 : index
    %c0_3 = arith.constant 0 : index
    %3 = vector.load %arg3[%c0_2, %c0_3] : memref<8x1xf32, #tpu.memory_space<vmem>>, vector<8x1xf32>
    %4 = vector.broadcast %3 : vector<8x1xf32> to vector<8x256xf32>
    %5 = arith.mulf %2, %4 : vector<8x256xf32>
    %c0_4 = arith.constant 0 : index
    %c0_5 = arith.constant 0 : index
    %6 = vector.load %arg4[%c0_4, %c0_5] : memref<8x1xf32, #tpu.memory_space<vmem>>, vector<8x1xf32>
    %7 = vector.broadcast %6 : vector<8x1xf32> to vector<8x256xf32>
    %8 = arith.addf %5, %7 : vector<8x256xf32>
    %cst = arith.constant 0.000000e+00 : f32
    %9 = vector.broadcast %cst : f32 to vector<8x256xf32>
    %10 = arith.maximumf %8, %9 : vector<8x256xf32>
    %c0_6 = arith.constant 0 : index
    %c0_7 = arith.constant 0 : index
    %c0_8 = arith.constant 0 : index
    %11 = vector.load %arg5[%c0_6, %c0_7, %c0_8] : memref<1x8x256xf32, #tpu.memory_space<vmem>>, vector<1x8x256xf32>
    %12 = vector.shape_cast %11 : vector<1x8x256xf32> to vector<8x256xf32>
    %13 = vector.shape_cast %10 : vector<8x256xf32> to vector<1x8x256xf32>
    tpu.vector_store %arg5[%c0_6, %c0_7, %c0_8], %13 {strides = array<i32>} : memref<1x8x256xf32, #tpu.memory_space<vmem>>, vector<1x8x256xf32>,
    return
  }
  func.func @transform_0(%arg0: i32, %arg1: i32) -> (i32, i32, i32) {
    %c0_i32 = arith.constant 0 : i32
    %c0_i32_0 = arith.constant 0 : i32
    return %arg0, %c0_i32, %arg1 : i32, i32, i32
  }
  func.func @transform_1(%arg0: i32, %arg1: i32) -> (i32, i32) {
    %c0_i32 = arith.constant 0 : i32
    %c0_i32_0 = arith.constant 0 : i32
    %c0_i32_1 = arith.constant 0 : i32
    return %c0_i32, %c0_i32_0 : i32, i32
  }
  func.func @transform_2(%arg0: i32, %arg1: i32) -> (i32, i32) {
    %c0_i32 = arith.constant 0 : i32
    %c0_i32_0 = arith.constant 0 : i32
    %c0_i32_1 = arith.constant 0 : i32
    return %c0_i32, %c0_i32_0 : i32, i32
  }
  func.func @transform_3(%arg0: i32, %arg1: i32) -> (i32, i32, i32) {
    %c0_i32 = arith.constant 0 : i32
    %c0_i32_0 = arith.constant 0 : i32
    return %arg0, %c0_i32, %arg1 : i32, i32, i32
  }
}

</mosaic_0001>

<llo_original>
// kernel: inception_module_transpose.3
$region0: #{inception_module_transpose.3}
  #allocation0 [shape = 'u32[]', space=smem, size = 0x4, offset = 0x4, fixed_abs, tag = 'smem constant byte address 0x4 - core index']
  #allocation1 [shape = 'u32[72,128]{1,0:T(1,128)}', space=vmem, size = 0x9000, scoped, tag = 'internal scratch']
  %s0 = inlined_call_operand.vmem [shape: bf16[2,8,256], index: 0, kind: input, shape index: {}]
  %s1 = inlined_call_operand.vmem [shape: f32[8,1], index: 1, kind: input, shape index: {}]
  %s2 = inlined_call_operand.vmem [shape: f32[8,1], index: 2, kind: input, shape index: {}]
  %s3 = inlined_call_operand.hbm [shape: f32[2,8,256], index: 3, kind: output, shape index: {}]
  %s4 = sld [smem:[#allocation0]]
  $region45: #{inception_module_transpose.3} parent=0
    _
  %s6 = ssub.s32 1, %s4
  %s7 = scalar_select 0, %s6, %s4
  $region1: #{inception_module_transpose.3} parent=0
    #allocation2 [shape = 'u8[16384]{0}', space=vmem, size = 0x4000, scoped, tag = 'output window, operand 0']
    #allocation3 [shape = 's32[2]{0}', space=sflag, size = 0x8, scoped, tag = 'scoped memory for inception_module_transpose.3']
    %8 = vsyncpa [#allocation3], 0
    %s9 = scalar_lea.sflag [#allocation3], 1
    %10 = vsyncpa %s9, 0
    loop: start=0, step=1, limit=4
    $region2: #{inception_module_transpose.3} parent=1 // loop_pre_header
      _
    $region3: #{inception_module_transpose.3} parent=1 // loop_header
      %s12 = sphi 0, %s16
      %p13 = scmp.ge.s32.totalorder %s12, 4
      %s19 = sphi 0, %s31
      %s20 = sphi 0, %s27
      %s21 = sphi 0, %s19
      %s22 = sphi 0, %s20
      %s23 = sphi 0, %s21
      %s24 = sphi 0, %s22
      %s36 = sphi 0, %s38
      %s39 = sphi 0, %s36
      %s40 = sphi 0, %s39
      %s56 = sphi 0, %s40
      %s60 = sphi 0, %s60
      %s62 = sphi 0, %s60
      %s63 = sphi 0, %s62
      %s77 = sphi 0, %s63
      %s81 = sphi 0, %s81
      %s83 = sphi 0, %s81
      %s84 = sphi 0, %s83
      %s98 = sphi 0, %s84
      %s106 = sphi 0, %s108
      %s109 = sphi 0, %s106
      %s110 = sphi 0, %s109
      %s126 = sphi 0, %s110
    $region4: #{inception_module_transpose.3} parent=1 // loop_header_branch
      %15 = sbr.rel (%p13) target = $region8
    $region5: #{inception_module_transpose.3} parent=1 // loop_body
      %s17 = ssub.s32 %s12, 1
      %s18 = ssub.s32 %s12, 2
      %s25 = sadd.s32 1, %s20
      %p26 = scmp.ge.s32.totalorder %s25, 1
      %s27 = scalar_select %p26, 0, %s25
      %s28 = sadd.s32 1, %s19
      %s29 = scalar_select %p26, %s28, %s19
      %p30 = scmp.ge.s32.totalorder %s29, 2
      %s31 = scalar_select %p30, 0, %s29
      %s32 = ssub.s32 %s19, %s31
      %s33 = ssub.s32 %s20, %s27
      %s34 = sor.u32 %s32, %s33
      %p35 = scmp.eq.s32.totalorder %s34, 0
      %s37 = sadd.s32 %s36, 1
      %s38 = scalar_select %p35, %s36, %s37
      %p41 = pneg %p35
      %p42 = scmp.eq.s32.totalorder %s12, 1
      %p43 = por %p41, %p42
      %p44 = scmp.ne.s32.totalorder %s36, %s39
      %p45 = scmp.eq.s32.totalorder %s12, 0
      %p46 = por %p44, %p45
      %p47 = scmp.ne.s32.totalorder %s36, %s39
      %p48 = scmp.eq.s32.totalorder %s17, 1
      %p49 = por %p47, %p48
      %p50 = scmp.ne.s32.totalorder %s39, %s40
      %p51 = scmp.eq.s32.totalorder %s17, 0
      %p52 = por %p50, %p51
      %p53 = scmp.ne.s32.totalorder %s39, %s40
      %p54 = scmp.eq.s32.totalorder %s18, 1
      %p55 = por %p53, %p54
      %p57 = scmp.ne.s32.totalorder %s40, %s56
      %p58 = scmp.eq.s32.totalorder %s18, 0
      %p59 = por %p57, %p58
      %s61 = sadd.s32 %s60, 1
      %p64 = scmp.eq.s32.totalorder %s12, 1
      %p65 = scmp.ne.s32.totalorder %s60, %s62
      %p66 = scmp.eq.s32.totalorder %s12, 0
      %p67 = por %p65, %p66
      %p68 = scmp.ne.s32.totalorder %s60, %s62
      %p69 = scmp.eq.s32.totalorder %s17, 1
      %p70 = por %p68, %p69
      %p71 = scmp.ne.s32.totalorder %s62, %s63
      %p72 = scmp.eq.s32.totalorder %s17, 0
      %p73 = por %p71, %p72
      %p74 = scmp.ne.s32.totalorder %s62, %s63
      %p75 = scmp.eq.s32.totalorder %s18, 1
      %p76 = por %p74, %p75
      %p78 = scmp.ne.s32.totalorder %s63, %s77
      %p79 = scmp.eq.s32.totalorder %s18, 0
      %p80 = por %p78, %p79
      %s82 = sadd.s32 %s81, 1
      %p85 = scmp.eq.s32.totalorder %s12, 1
      %p86 = scmp.ne.s32.totalorder %s81, %s83
      %p87 = scmp.eq.s32.totalorder %s12, 0
      %p88 = por %p86, %p87
      %p89 = scmp.ne.s32.totalorder %s81, %s83
      %p90 = scmp.eq.s32.totalorder %s17, 1
      %p91 = por %p89, %p90
      %p92 = scmp.ne.s32.totalorder %s83, %s84
      %p93 = scmp.eq.s32.totalorder %s17, 0
      %p94 = por %p92, %p93
      %p95 = scmp.ne.s32.totalorder %s83, %s84
      %p96 = scmp.eq.s32.totalorder %s18, 1
      %p97 = por %p95, %p96
      %p99 = scmp.ne.s32.totalorder %s84, %s98
      %p100 = scmp.eq.s32.totalorder %s18, 0
      %p101 = por %p99, %p100
      %s102 = ssub.s32 %s19, %s31
      %s103 = ssub.s32 %s20, %s27
      %s104 = sor.u32 %s102, %s103
      %p105 = scmp.eq.s32.totalorder %s104, 0
      %s107 = sadd.s32 %s106, 1
      %s108 = scalar_select %p105, %s106, %s107
      %p111 = pneg %p105
      %p112 = scmp.eq.s32.totalorder %s12, 1
      %p113 = por %p111, %p112
      %p114 = scmp.ne.s32.totalorder %s106, %s109
      %p115 = scmp.eq.s32.totalorder %s12, 0
      %p116 = por %p114, %p115
      %p117 = scmp.ne.s32.totalorder %s106, %s109
      %p118 = scmp.eq.s32.totalorder %s17, 1
      %p119 = por %p117, %p118
      %p120 = scmp.ne.s32.totalorder %s109, %s110
      %p121 = scmp.eq.s32.totalorder %s17, 0
      %p122 = por %p120, %p121
      %p123 = scmp.ne.s32.totalorder %s109, %s110
      %p124 = scmp.eq.s32.totalorder %s18, 1
      %p125 = por %p123, %p124
      %p127 = scmp.ne.s32.totalorder %s110, %s126
      %p128 = scmp.eq.s32.totalorder %s18, 0
      %p129 = por %p127, %p128
      %p130 = scmp.le.s32.totalorder 1, %s12
      %p131 = scmp.lt.s32.totalorder %s12, 3
      %p132 = pnand %p130, %p131
      %p133 = pneg %p132
      // Predicated region
      $region9: #{inception_module_transpose.3} parent=5 // pred_check
        _
      $region10: #{inception_module_transpose.3} parent=5 // pred_check_branch
        %135 = sbr.rel (%p132) target = $region12
      $region11: #{inception_module_transpose.3} parent=5 // pred_region
        %s136 = ssub.s32 %s12, 1
        // Predicated region
        $region13: #{inception_module_transpose.3} parent=11 // pred_check
          %p137 = pneg %p73
        $region14: #{inception_module_transpose.3} parent=11 // pred_check_branch
          %139 = sbr.rel (%p137) target = $region16
        $region15: #{inception_module_transpose.3} parent=11 // pred_region
          _
        $region16: #{inception_module_transpose.3} parent=11 // pred_fallthru
          _
        // Predicated region
        $region17: #{inception_module_transpose.3} parent=11 // pred_check
          %p140 = pneg %p94
        $region18: #{inception_module_transpose.3} parent=11 // pred_check_branch
          %142 = sbr.rel (%p140) target = $region20
        $region19: #{inception_module_transpose.3} parent=11 // pred_region
          _
        $region20: #{inception_module_transpose.3} parent=11 // pred_fallthru
          _
      $region12: #{inception_module_transpose.3} parent=5 // pred_fallthru
        _
      %p143 = scmp.lt.s32.totalorder %s12, 2
      // Predicated region
      $region21: #{inception_module_transpose.3} parent=5 // pred_check
        %p144 = pneg %p143
      $region22: #{inception_module_transpose.3} parent=5 // pred_check_branch
        %146 = sbr.rel (%p144) target = $region24
      $region23: #{inception_module_transpose.3} parent=5 // pred_region
        // Predicated region
        $region25: #{inception_module_transpose.3} parent=23 // pred_check
          %p147 = pneg %p46
        $region26: #{inception_module_transpose.3} parent=23 // pred_check_branch
          %149 = sbr.rel (%p147) target = $region28
        $region27: #{inception_module_transpose.3} parent=23 // pred_region
          %s150 = smul.u32 2, %s20
          %p151 = scmp.lt.s32.totalorder %s19, 1
          %s152 = scalar_select %p151, %s19, 1
          %p153 = scmp.lt.s32.totalorder %s150, 1
          %s154 = scalar_select %p153, %s150, 1
          %s155 = smul.addr %s152, 2
          %s156 = sadd.s32 %s154, %s155
          %s157 = smul.addr %s156, 4
          %s158 = scalar_lea.vmem %s0, %s157
          %s159 = smul.u32 2, %s20
        $region28: #{inception_module_transpose.3} parent=23 // pred_fallthru
          _
      $region24: #{inception_module_transpose.3} parent=5 // pred_fallthru
        _
      %p160 = scmp.le.s32.totalorder 1, %s12
      %p161 = scmp.lt.s32.totalorder %s12, 3
      %p162 = pnand %p160, %p161
      %p163 = pneg %p162
      // Predicated region
      $region29: #{inception_module_transpose.3} parent=5 // pred_check
        _
      $region30: #{inception_module_transpose.3} parent=5 // pred_check_branch
        %165 = sbr.rel (%p162) target = $region32
      $region31: #{inception_module_transpose.3} parent=5 // pred_region
        %s166 = ssub.s32 %s12, 1
        %s167 = smul.u32 2, %s22
        %p168 = scmp.lt.s32.totalorder %s21, 1
        %s169 = scalar_select %p168, %s21, 1
        %p170 = scmp.lt.s32.totalorder %s167, 1
        %s171 = scalar_select %p170, %s167, 1
        %s172 = smul.addr %s169, 2
        %s173 = sadd.s32 %s171, %s172
        %s174 = smul.addr %s173, 4
        %s175 = scalar_lea.vmem %s0, %s174
        %p176 = pneg %p52
        %p177 = pneg %p49
        %p178 = pneg %p73
        %p179 = pneg %p70
        %p180 = pneg %p94
        %p181 = pneg %p91
        %p182 = pneg %p122
        %p183 = pneg %p119
        %s184 = sand.u32 %s109, 1
        %s185 = scalar_lea.sflag [#allocation3], %s184
        %s186 = sand.u32 %s109, 1
        %s187 = smul.addr %s186, 16
        %s188 = scalar_lea.vmem [#allocation2], %s187
        %s189 = smul.u32 2, %s22
        %p190 = scmp.lt.s32.totalorder %s21, 1
        %s191 = scalar_select %p190, %s21, 1
        %p192 = scmp.lt.s32.totalorder %s189, 1
        %s193 = scalar_select %p192, %s189, 1
        %s194 = smul.addr %s191, 2
        %s195 = sadd.s32 %s193, %s194
        %s196 = smul.addr %s195, 4
        %s197 = scalar_lea.vmem %s0, %s196
        %s198 = smul.u32 2, %s22
        %s199 = smul.u32 2, %s22
        %v200 = vld [vmem:[%s197] sm:$0xff]
        %v201 = vunpack.c.l.bf16 %v200
        %v202 = vunpack.c.h.bf16 %v200
        %v203 = vld [vmem:[%s1] sm:$0xff]
        %205 = vset.pattern.permute.xlu0 0
        %206 = vperm.xlu0 %205, %v203
        %v207 = vpop.permute.xlu0 %206
        %v209 = vmul.f32 %v201, %v207
        %v210 = vmul.f32 %v202, %v207
        %v211 = vld [vmem:[%s2] sm:$0xff]
        %213 = vset.pattern.permute.xlu0 0
        %214 = vperm.xlu0 %213, %v211
        %v215 = vpop.permute.xlu0 %214
        %v217 = vadd.f32 %v209, %v215
        %v218 = vadd.f32 %v210, %v215
        %v219 = vmax.f32 %v217, 0.0
        %v220 = vmax.f32 %v218, 0.0
        %221 = vst [vmem:[%s188] sm:$0xff] %v219
        %222 = vst [vmem:[%s188 + $0x8] sm:$0xff] %v220
        %s223 = sand.u32 %s109, 1
        %s224 = scalar_lea.sflag [#allocation3], %s223
        %s225 = sand.u32 %s109, 1
        %s226 = smul.addr %s225, 16
        %s227 = scalar_lea.vmem [#allocation2], %s226
        // Predicated region
        $region33: #{inception_module_transpose.3} parent=31 // pred_check
          %p228 = pneg %p119
        $region34: #{inception_module_transpose.3} parent=31 // pred_check_branch
          %230 = sbr.rel (%p228) target = $region36
        $region35: #{inception_module_transpose.3} parent=31 // pred_region
          %s231 = smul.u32 2, %s22
          %233 = vsyncadd %s224, 0
          %s234 = smul.addr %s21, 2
          %s235 = sadd.s32 %s231, %s234
          %s236 = smul.addr %s235, 8
          %s237 = scalar_lea.hbm %s3, %s236
          %s239 = sshll.u32 %s227, 4
          %s240 = int_to_ptr.vmem [resolvable:$true] %s239
          %s241 = sshll.u32 %s237, 4
          %s242 = int_to_ptr.hbm [resolvable:$true] %s241
          %244 = dma.vmem_to_hbm [thread:$0]  %s240, 256, %s242, %s224
        $region36: #{inception_module_transpose.3} parent=31 // pred_fallthru
          _
      $region32: #{inception_module_transpose.3} parent=5 // pred_fallthru
        _
      %p245 = scmp.le.s32.totalorder 2, %s12
      // Predicated region
      $region37: #{inception_module_transpose.3} parent=5 // pred_check
        %p246 = pneg %p245
      $region38: #{inception_module_transpose.3} parent=5 // pred_check_branch
        %248 = sbr.rel (%p246) target = $region40
      $region39: #{inception_module_transpose.3} parent=5 // pred_region
        %s249 = ssub.s32 %s12, 2
        // Predicated region
        $region41: #{inception_module_transpose.3} parent=39 // pred_check
          %p250 = pneg %p125
        $region42: #{inception_module_transpose.3} parent=39 // pred_check_branch
          %252 = sbr.rel (%p250) target = $region44
        $region43: #{inception_module_transpose.3} parent=39 // pred_region
          %s253 = sand.u32 %s110, 1
          %s254 = scalar_lea.sflag [#allocation3], %s253
          %s255 = sand.u32 %s110, 1
          %s256 = smul.addr %s255, 16
          %s257 = scalar_lea.vmem [#allocation2], %s256
          %259 = dma.done %s254, 256
        $region44: #{inception_module_transpose.3} parent=39 // pred_fallthru
          _
      $region40: #{inception_module_transpose.3} parent=5 // pred_fallthru
        _
    $region6: #{inception_module_transpose.3} parent=1 // loop_footer
      %s16 = sadd.s32 1, %s12
    $region7: #{inception_module_transpose.3} parent=1 // loop_footer_branch
      %11 = sbr.rel target = $region3
    $region8: #{inception_module_transpose.3} parent=1 // loop_exit
      _
    %260 = vsyncpa [#allocation3], 1
    %s261 = scalar_lea.sflag [#allocation3], 1
    %262 = vsyncpa %s261, 1

// kernel: inception_module_transpose.2
$region0: #{inception_module_transpose.2}
  #allocation0 [shape = 'u32[]', space=smem, size = 0x4, offset = 0x4, fixed_abs, tag = 'smem constant byte address 0x4 - core index']
  #allocation1 [shape = 'u32[72,128]{1,0:T(1,128)}', space=vmem, size = 0x9000, scoped, tag = 'internal scratch']
  %s0 = inlined_call_operand.vmem [shape: f32[2,8,294], index: 0, kind: input, shape index: {}]
  %s1 = inlined_call_operand.vmem [shape: s32[2,8,256], index: 1, kind: input, shape index: {}, may-alias: {1,2,3}]
  %s2 = inlined_call_operand.vmem [shape: s32[2,8,256], index: 2, kind: input, shape index: {}, may-alias: {1,2,3}]
  %s3 = inlined_call_operand.vmem [shape: s32[2,8,256], index: 3, kind: input, shape index: {}, may-alias: {1,2,3}]
  %s4 = inlined_call_operand.vmem [shape: f32[32,312], index: 4, kind: input, shape index: {}]
  %s5 = inlined_call_operand.vmem [shape: bf16[2,8,256], index: 5, kind: output, shape index: {0}]
  %s6 = inlined_call_operand.vmem [shape: f32[2,8,2], index: 6, kind: output, shape index: {1}]
  %7 = xla_tuple %s5, %s6
  %s8 = sld [smem:[#allocation0]]
  $region65: #{inception_module_transpose.2} parent=0
    _
  %s10 = ssub.s32 1, %s8
  %s11 = scalar_select 0, %s10, %s8
  loop: start=0, step=1, limit=4
  $region2: #{inception_module_transpose.2} parent=0 // loop_pre_header
    _
  $region3: #{inception_module_transpose.2} parent=0 // loop_header
    %s13 = sphi 0, %s17
    %p14 = scmp.ge.s32.totalorder %s13, 4
    %s20 = sphi 0, %s32
    %s21 = sphi 0, %s28
    %s22 = sphi 0, %s20
    %s23 = sphi 0, %s21
    %s24 = sphi 0, %s22
    %s25 = sphi 0, %s23
    %s35 = sphi 0, %s37
    %s38 = sphi 0, %s35
    %s39 = sphi 0, %s38
    %s55 = sphi 0, %s39
    %s71 = sphi 0, %s73
    %s74 = sphi 0, %s71
    %s75 = sphi 0, %s74
    %s91 = sphi 0, %s75
    %s99 = sphi 0, %s101
    %s102 = sphi 0, %s99
    %s103 = sphi 0, %s102
    %s119 = sphi 0, %s103
    %s135 = sphi 0, %s137
    %s138 = sphi 0, %s135
    %s139 = sphi 0, %s138
    %s155 = sphi 0, %s139
    %s159 = sphi 0, %s159
    %s161 = sphi 0, %s159
    %s162 = sphi 0, %s161
    %s176 = sphi 0, %s162
    %s184 = sphi 0, %s186
    %s187 = sphi 0, %s184
    %s188 = sphi 0, %s187
    %s204 = sphi 0, %s188
    %s210 = sphi 0, %s212
    %s213 = sphi 0, %s210
    %s214 = sphi 0, %s213
    %s230 = sphi 0, %s214
  $region4: #{inception_module_transpose.2} parent=0 // loop_header_branch
    %16 = sbr.rel (%p14) target = $region8
  $region5: #{inception_module_transpose.2} parent=0 // loop_body
    %s18 = ssub.s32 %s13, 1
    %s19 = ssub.s32 %s13, 2
    %s26 = sadd.s32 1, %s21
    %p27 = scmp.ge.s32.totalorder %s26, 1
    %s28 = scalar_select %p27, 0, %s26
    %s29 = sadd.s32 1, %s20
    %s30 = scalar_select %p27, %s29, %s20
    %p31 = scmp.ge.s32.totalorder %s30, 2
    %s32 = scalar_select %p31, 0, %s30
    %s33 = ssub.s32 %s20, %s32
    %p34 = scmp.eq.s32.totalorder %s33, 0
    %s36 = sadd.s32 %s35, 1
    %s37 = scalar_select %p34, %s35, %s36
    %p40 = pneg %p34
    %p41 = scmp.eq.s32.totalorder %s13, 1
    %p42 = por %p40, %p41
    %p43 = scmp.ne.s32.totalorder %s35, %s38
    %p44 = scmp.eq.s32.totalorder %s13, 0
    %p45 = por %p43, %p44
    %p46 = scmp.ne.s32.totalorder %s35, %s38
    %p47 = scmp.eq.s32.totalorder %s18, 1
    %p48 = por %p46, %p47
    %p49 = scmp.ne.s32.totalorder %s38, %s39
    %p50 = scmp.eq.s32.totalorder %s18, 0
    %p51 = por %p49, %p50
    %p52 = scmp.ne.s32.totalorder %s38, %s39
    %p53 = scmp.eq.s32.totalorder %s19, 1
    %p54 = por %p52, %p53
    %p56 = scmp.ne.s32.totalorder %s39, %s55
    %p57 = scmp.eq.s32.totalorder %s19, 0
    %p58 = por %p56, %p57
    %s59 = smul.u32 %s21, 2
    %s60 = ssub.s32 %s59, 1
    %p61 = scmp.gt.s32.totalorder %s60, 0
    %s62 = scalar_select %p61, %s60, 0
    %s63 = smul.u32 %s28, 2
    %s64 = ssub.s32 %s63, 1
    %p65 = scmp.gt.s32.totalorder %s64, 0
    %s66 = scalar_select %p65, %s64, 0
    %s67 = ssub.s32 %s20, %s32
    %s68 = ssub.s32 %s62, %s66
    %s69 = sor.u32 %s67, %s68
    %p70 = scmp.eq.s32.totalorder %s69, 0
    %s72 = sadd.s32 %s71, 1
    %s73 = scalar_select %p70, %s71, %s72
    %p76 = pneg %p70
    %p77 = scmp.eq.s32.totalorder %s13, 1
    %p78 = por %p76, %p77
    %p79 = scmp.ne.s32.totalorder %s71, %s74
    %p80 = scmp.eq.s32.totalorder %s13, 0
    %p81 = por %p79, %p80
    %p82 = scmp.ne.s32.totalorder %s71, %s74
    %p83 = scmp.eq.s32.totalorder %s18, 1
    %p84 = por %p82, %p83
    %p85 = scmp.ne.s32.totalorder %s74, %s75
    %p86 = scmp.eq.s32.totalorder %s18, 0
    %p87 = por %p85, %p86
    %p88 = scmp.ne.s32.totalorder %s74, %s75
    %p89 = scmp.eq.s32.totalorder %s19, 1
    %p90 = por %p88, %p89
    %p92 = scmp.ne.s32.totalorder %s75, %s91
    %p93 = scmp.eq.s32.totalorder %s19, 0
    %p94 = por %p92, %p93
    %s95 = ssub.s32 %s20, %s32
    %s96 = ssub.s32 %s21, %s28
    %s97 = sor.u32 %s95, %s96
    %p98 = scmp.eq.s32.totalorder %s97, 0
    %s100 = sadd.s32 %s99, 1
    %s101 = scalar_select %p98, %s99, %s100
    %p104 = pneg %p98
    %p105 = scmp.eq.s32.totalorder %s13, 1
    %p106 = por %p104, %p105
    %p107 = scmp.ne.s32.totalorder %s99, %s102
    %p108 = scmp.eq.s32.totalorder %s13, 0
    %p109 = por %p107, %p108
    %p110 = scmp.ne.s32.totalorder %s99, %s102
    %p111 = scmp.eq.s32.totalorder %s18, 1
    %p112 = por %p110, %p111
    %p113 = scmp.ne.s32.totalorder %s102, %s103
    %p114 = scmp.eq.s32.totalorder %s18, 0
    %p115 = por %p113, %p114
    %p116 = scmp.ne.s32.totalorder %s102, %s103
    %p117 = scmp.eq.s32.totalorder %s19, 1
    %p118 = por %p116, %p117
    %p120 = scmp.ne.s32.totalorder %s103, %s119
    %p121 = scmp.eq.s32.totalorder %s19, 0
    %p122 = por %p120, %p121
    %s123 = sadd.s32 %s21, 1
    %s124 = smul.u32 %s123, 2
    %p125 = scmp.lt.s32.totalorder %s124, 1
    %s126 = scalar_select %p125, %s124, 1
    %s127 = sadd.s32 %s28, 1
    %s128 = smul.u32 %s127, 2
    %p129 = scmp.lt.s32.totalorder %s128, 1
    %s130 = scalar_select %p129, %s128, 1
    %s131 = ssub.s32 %s20, %s32
    %s132 = ssub.s32 %s126, %s130
    %s133 = sor.u32 %s131, %s132
    %p134 = scmp.eq.s32.totalorder %s133, 0
    %s136 = sadd.s32 %s135, 1
    %s137 = scalar_select %p134, %s135, %s136
    %p140 = pneg %p134
    %p141 = scmp.eq.s32.totalorder %s13, 1
    %p142 = por %p140, %p141
    %p143 = scmp.ne.s32.totalorder %s135, %s138
    %p144 = scmp.eq.s32.totalorder %s13, 0
    %p145 = por %p143, %p144
    %p146 = scmp.ne.s32.totalorder %s135, %s138
    %p147 = scmp.eq.s32.totalorder %s18, 1
    %p148 = por %p146, %p147
    %p149 = scmp.ne.s32.totalorder %s138, %s139
    %p150 = scmp.eq.s32.totalorder %s18, 0
    %p151 = por %p149, %p150
    %p152 = scmp.ne.s32.totalorder %s138, %s139
    %p153 = scmp.eq.s32.totalorder %s19, 1
    %p154 = por %p152, %p153
    %p156 = scmp.ne.s32.totalorder %s139, %s155
    %p157 = scmp.eq.s32.totalorder %s19, 0
    %p158 = por %p156, %p157
    %s160 = sadd.s32 %s159, 1
    %p163 = scmp.eq.s32.totalorder %s13, 1
    %p164 = scmp.ne.s32.totalorder %s159, %s161
    %p165 = scmp.eq.s32.totalorder %s13, 0
    %p166 = por %p164, %p165
    %p167 = scmp.ne.s32.totalorder %s159, %s161
    %p168 = scmp.eq.s32.totalorder %s18, 1
    %p169 = por %p167, %p168
    %p170 = scmp.ne.s32.totalorder %s161, %s162
    %p171 = scmp.eq.s32.totalorder %s18, 0
    %p172 = por %p170, %p171
    %p173 = scmp.ne.s32.totalorder %s161, %s162
    %p174 = scmp.eq.s32.totalorder %s19, 1
    %p175 = por %p173, %p174
    %p177 = scmp.ne.s32.totalorder %s162, %s176
    %p178 = scmp.eq.s32.totalorder %s19, 0
    %p179 = por %p177, %p178
    %s180 = ssub.s32 %s20, %s32
    %s181 = ssub.s32 %s21, %s28
    %s182 = sor.u32 %s180, %s181
    %p183 = scmp.eq.s32.totalorder %s182, 0
    %s185 = sadd.s32 %s184, 1
    %s186 = scalar_select %p183, %s184, %s185
    %p189 = pneg %p183
    %p190 = scmp.eq.s32.totalorder %s13, 1
    %p191 = por %p189, %p190
    %p192 = scmp.ne.s32.totalorder %s184, %s187
    %p193 = scmp.eq.s32.totalorder %s13, 0
    %p194 = por %p192, %p193
    %p195 = scmp.ne.s32.totalorder %s184, %s187
    %p196 = scmp.eq.s32.totalorder %s18, 1
    %p197 = por %p195, %p196
    %p198 = scmp.ne.s32.totalorder %s187, %s188
    %p199 = scmp.eq.s32.totalorder %s18, 0
    %p200 = por %p198, %p199
    %p201 = scmp.ne.s32.totalorder %s187, %s188
    %p202 = scmp.eq.s32.totalorder %s19, 1
    %p203 = por %p201, %p202
    %p205 = scmp.ne.s32.totalorder %s188, %s204
    %p206 = scmp.eq.s32.totalorder %s19, 0
    %p207 = por %p205, %p206
    %s208 = ssub.s32 %s20, %s32
    %p209 = scmp.eq.s32.totalorder %s208, 0
    %s211 = sadd.s32 %s210, 1
    %s212 = scalar_select %p209, %s210, %s211
    %p215 = pneg %p209
    %p216 = scmp.eq.s32.totalorder %s13, 1
    %p217 = por %p215, %p216
    %p218 = scmp.ne.s32.totalorder %s210, %s213
    %p219 = scmp.eq.s32.totalorder %s13, 0
    %p220 = por %p218, %p219
    %p221 = scmp.ne.s32.totalorder %s210, %s213
    %p222 = scmp.eq.s32.totalorder %s18, 1
    %p223 = por %p221, %p222
    %p224 = scmp.ne.s32.totalorder %s213, %s214
    %p225 = scmp.eq.s32.totalorder %s18, 0
    %p226 = por %p224, %p225
    %p227 = scmp.ne.s32.totalorder %s213, %s214
    %p228 = scmp.eq.s32.totalorder %s19, 1
    %p229 = por %p227, %p228
    %p231 = scmp.ne.s32.totalorder %s214, %s230
    %p232 = scmp.eq.s32.totalorder %s19, 0
    %p233 = por %p231, %p232
    %p234 = scmp.le.s32.totalorder 1, %s13
    %p235 = scmp.lt.s32.totalorder %s13, 3
    %p236 = pnand %p234, %p235
    %p237 = pneg %p236
    // Predicated region
    $region9: #{inception_module_transpose.2} parent=5 // pred_check
      _
    $region10: #{inception_module_transpose.2} parent=5 // pred_check_branch
      %239 = sbr.rel (%p236) target = $region12
    $region11: #{inception_module_transpose.2} parent=5 // pred_region
      %s240 = ssub.s32 %s13, 1
      // Predicated region
      $region13: #{inception_module_transpose.2} parent=11 // pred_check
        %p241 = pneg %p172
      $region14: #{inception_module_transpose.2} parent=11 // pred_check_branch
        %243 = sbr.rel (%p241) target = $region16
      $region15: #{inception_module_transpose.2} parent=11 // pred_region
        _
      $region16: #{inception_module_transpose.2} parent=11 // pred_fallthru
        _
    $region12: #{inception_module_transpose.2} parent=5 // pred_fallthru
      _
    %p244 = scmp.lt.s32.totalorder %s13, 2
    // Predicated region
    $region17: #{inception_module_transpose.2} parent=5 // pred_check
      %p245 = pneg %p244
    $region18: #{inception_module_transpose.2} parent=5 // pred_check_branch
      %247 = sbr.rel (%p245) target = $region20
    $region19: #{inception_module_transpose.2} parent=5 // pred_region
      // Predicated region
      $region21: #{inception_module_transpose.2} parent=19 // pred_check
        %p248 = pneg %p45
      $region22: #{inception_module_transpose.2} parent=19 // pred_check_branch
        %250 = sbr.rel (%p248) target = $region24
      $region23: #{inception_module_transpose.2} parent=19 // pred_region
        %p251 = scmp.lt.s32.totalorder %s20, 1
        %s252 = scalar_select %p251, %s20, 1
        %s253 = smul.addr %s252, 3
        %s254 = smul.addr %s253, 8
        %s255 = scalar_lea.vmem %s0, %s254
      $region24: #{inception_module_transpose.2} parent=19 // pred_fallthru
        _
      // Predicated region
      $region25: #{inception_module_transpose.2} parent=19 // pred_check
        %p256 = pneg %p81
      $region26: #{inception_module_transpose.2} parent=19 // pred_check_branch
        %258 = sbr.rel (%p256) target = $region28
      $region27: #{inception_module_transpose.2} parent=19 // pred_region
        %s259 = smul.u32 %s21, 2
        %s260 = ssub.s32 %s259, 1
        %p261 = scmp.gt.s32.totalorder %s260, 0
        %s262 = scalar_select %p261, %s260, 0
        %p263 = scmp.lt.s32.totalorder %s20, 1
        %s264 = scalar_select %p263, %s20, 1
        %p265 = scmp.lt.s32.totalorder %s262, 1
        %s266 = scalar_select %p265, %s262, 1
        %s267 = smul.addr %s264, 2
        %s268 = sadd.s32 %s266, %s267
        %s269 = smul.addr %s268, 8
        %s270 = scalar_lea.vmem %s1, %s269
        %s271 = smul.u32 %s21, 2
        %s272 = ssub.s32 %s271, 1
        %p273 = scmp.gt.s32.totalorder %s272, 0
        %s274 = scalar_select %p273, %s272, 0
      $region28: #{inception_module_transpose.2} parent=19 // pred_fallthru
        _
      // Predicated region
      $region29: #{inception_module_transpose.2} parent=19 // pred_check
        %p275 = pneg %p109
      $region30: #{inception_module_transpose.2} parent=19 // pred_check_branch
        %277 = sbr.rel (%p275) target = $region32
      $region31: #{inception_module_transpose.2} parent=19 // pred_region
        %s278 = smul.u32 2, %s21
        %p279 = scmp.lt.s32.totalorder %s20, 1
        %s280 = scalar_select %p279, %s20, 1
        %p281 = scmp.lt.s32.totalorder %s278, 1
        %s282 = scalar_select %p281, %s278, 1
        %s283 = smul.addr %s280, 2
        %s284 = sadd.s32 %s282, %s283
        %s285 = smul.addr %s284, 8
        %s286 = scalar_lea.vmem %s2, %s285
        %s287 = smul.u32 2, %s21
      $region32: #{inception_module_transpose.2} parent=19 // pred_fallthru
        _
      // Predicated region
      $region33: #{inception_module_transpose.2} parent=19 // pred_check
        %p288 = pneg %p145
      $region34: #{inception_module_transpose.2} parent=19 // pred_check_branch
        %290 = sbr.rel (%p288) target = $region36
      $region35: #{inception_module_transpose.2} parent=19 // pred_region
        %s291 = sadd.s32 %s21, 1
        %s292 = smul.u32 %s291, 2
        %p293 = scmp.lt.s32.totalorder %s292, 1
        %s294 = scalar_select %p293, %s292, 1
        %p295 = scmp.lt.s32.totalorder %s20, 1
        %s296 = scalar_select %p295, %s20, 1
        %p297 = scmp.lt.s32.totalorder %s294, 1
        %s298 = scalar_select %p297, %s294, 1
        %s299 = smul.addr %s296, 2
        %s300 = sadd.s32 %s298, %s299
        %s301 = smul.addr %s300, 8
        %s302 = scalar_lea.vmem %s3, %s301
        %s303 = sadd.s32 %s21, 1
        %s304 = smul.u32 %s303, 2
        %p305 = scmp.lt.s32.totalorder %s304, 1
        %s306 = scalar_select %p305, %s304, 1
      $region36: #{inception_module_transpose.2} parent=19 // pred_fallthru
        _
    $region20: #{inception_module_transpose.2} parent=5 // pred_fallthru
      _
    %p307 = scmp.le.s32.totalorder 1, %s13
    %p308 = scmp.lt.s32.totalorder %s13, 3
    %p309 = pnand %p307, %p308
    %p310 = pneg %p309
    // Predicated region
    $region37: #{inception_module_transpose.2} parent=5 // pred_check
      _
    $region38: #{inception_module_transpose.2} parent=5 // pred_check_branch
      %312 = sbr.rel (%p309) target = $region40
    $region39: #{inception_module_transpose.2} parent=5 // pred_region
      %s313 = ssub.s32 %s13, 1
      %p314 = scmp.lt.s32.totalorder %s22, 1
      %s315 = scalar_select %p314, %s22, 1
      %s316 = smul.addr %s315, 3
      %s317 = smul.addr %s316, 8
      %s318 = scalar_lea.vmem %s0, %s317
      %p319 = pneg %p51
      %p320 = pneg %p48
      %s321 = smul.u32 %s23, 2
      %s322 = ssub.s32 %s321, 1
      %p323 = scmp.gt.s32.totalorder %s322, 0
      %s324 = scalar_select %p323, %s322, 0
      %p325 = scmp.lt.s32.totalorder %s22, 1
      %s326 = scalar_select %p325, %s22, 1
      %p327 = scmp.lt.s32.totalorder %s324, 1
      %s328 = scalar_select %p327, %s324, 1
      %s329 = smul.addr %s326, 2
      %s330 = sadd.s32 %s328, %s329
      %s331 = smul.addr %s330, 8
      %s332 = scalar_lea.vmem %s1, %s331
      %p333 = pneg %p87
      %p334 = pneg %p84
      %s335 = smul.u32 2, %s23
      %p336 = scmp.lt.s32.totalorder %s22, 1
      %s337 = scalar_select %p336, %s22, 1
      %p338 = scmp.lt.s32.totalorder %s335, 1
      %s339 = scalar_select %p338, %s335, 1
      %s340 = smul.addr %s337, 2
      %s341 = sadd.s32 %s339, %s340
      %s342 = smul.addr %s341, 8
      %s343 = scalar_lea.vmem %s2, %s342
      %p344 = pneg %p115
      %p345 = pneg %p112
      %s346 = sadd.s32 %s23, 1
      %s347 = smul.u32 %s346, 2
      %p348 = scmp.lt.s32.totalorder %s347, 1
      %s349 = scalar_select %p348, %s347, 1
      %p350 = scmp.lt.s32.totalorder %s22, 1
      %s351 = scalar_select %p350, %s22, 1
      %p352 = scmp.lt.s32.totalorder %s349, 1
      %s353 = scalar_select %p352, %s349, 1
      %s354 = smul.addr %s351, 2
      %s355 = sadd.s32 %s353, %s354
      %s356 = smul.addr %s355, 8
      %s357 = scalar_lea.vmem %s3, %s356
      %p358 = pneg %p151
      %p359 = pneg %p148
      %p360 = pneg %p172
      %p361 = pneg %p169
      %p362 = pneg %p200
      %p363 = pneg %p197
      %s364 = smul.u32 2, %s23
      %p365 = scmp.lt.s32.totalorder %s22, 1
      %s366 = scalar_select %p365, %s22, 1
      %p367 = scmp.lt.s32.totalorder %s364, 1
      %s368 = scalar_select %p367, %s364, 1
      %s369 = smul.addr %s366, 2
      %s370 = sadd.s32 %s368, %s369
      %s371 = smul.addr %s370, 4
      %s372 = scalar_lea.vmem %s5, %s371
      %p373 = pneg %p226
      %p374 = pneg %p223
      %p375 = scmp.lt.s32.totalorder %s22, 1
      %s376 = scalar_select %p375, %s22, 1
      %s377 = smul.addr %s376, 8
      %s378 = scalar_lea.vmem %s6, %s377
      %p379 = scmp.lt.s32.totalorder %s22, 1
      %s380 = scalar_select %p379, %s22, 1
      %s381 = smul.addr %s380, 3
      %s382 = smul.addr %s381, 8
      %s383 = scalar_lea.vmem %s0, %s382
      %s384 = smul.u32 %s23, 2
      %s385 = ssub.s32 %s384, 1
      %p386 = scmp.gt.s32.totalorder %s385, 0
      %s387 = scalar_select %p386, %s385, 0
      %p388 = scmp.lt.s32.totalorder %s22, 1
      %s389 = scalar_select %p388, %s22, 1
      %p390 = scmp.lt.s32.totalorder %s387, 1
      %s391 = scalar_select %p390, %s387, 1
      %s392 = smul.addr %s389, 2
      %s393 = sadd.s32 %s391, %s392
      %s394 = smul.addr %s393, 8
      %s395 = scalar_lea.vmem %s1, %s394
      %s396 = smul.u32 %s23, 2
      %s397 = ssub.s32 %s396, 1
      %p398 = scmp.gt.s32.totalorder %s397, 0
      %s399 = scalar_select %p398, %s397, 0
      %s400 = smul.u32 2, %s23
      %p401 = scmp.lt.s32.totalorder %s22, 1
      %s402 = scalar_select %p401, %s22, 1
      %p403 = scmp.lt.s32.totalorder %s400, 1
      %s404 = scalar_select %p403, %s400, 1
      %s405 = smul.addr %s402, 2
      %s406 = sadd.s32 %s404, %s405
      %s407 = smul.addr %s406, 8
      %s408 = scalar_lea.vmem %s2, %s407
      %s409 = smul.u32 2, %s23
      %s410 = sadd.s32 %s23, 1
      %s411 = smul.u32 %s410, 2
      %p412 = scmp.lt.s32.totalorder %s411, 1
      %s413 = scalar_select %p412, %s411, 1
      %p414 = scmp.lt.s32.totalorder %s22, 1
      %s415 = scalar_select %p414, %s22, 1
      %p416 = scmp.lt.s32.totalorder %s413, 1
      %s417 = scalar_select %p416, %s413, 1
      %s418 = smul.addr %s415, 2
      %s419 = sadd.s32 %s417, %s418
      %s420 = smul.addr %s419, 8
      %s421 = scalar_lea.vmem %s3, %s420
      %s422 = sadd.s32 %s23, 1
      %s423 = smul.u32 %s422, 2
      %p424 = scmp.lt.s32.totalorder %s423, 1
      %s425 = scalar_select %p424, %s423, 1
      %s426 = smul.u32 2, %s23
      %p427 = scmp.lt.s32.totalorder %s22, 1
      %s428 = scalar_select %p427, %s22, 1
      %p429 = scmp.lt.s32.totalorder %s426, 1
      %s430 = scalar_select %p429, %s426, 1
      %s431 = smul.addr %s428, 2
      %s432 = sadd.s32 %s430, %s431
      %s433 = smul.addr %s432, 4
      %s434 = scalar_lea.vmem %s5, %s433
      %s435 = smul.u32 2, %s23
      %p436 = scmp.lt.s32.totalorder %s22, 1
      %s437 = scalar_select %p436, %s22, 1
      %s438 = smul.addr %s437, 8
      %s439 = scalar_lea.vmem %s6, %s438
      %s440 = smul.u32 %s23, 256
      %s441 = sshra.s32 %s440, 7
      %s442 = sand.u32 %s440, 127
      %s443 = smul.addr %s441, 8
      %s444 = scalar_lea.vmem %s383, %s443
      %v445 = vld [vmem:[%s444] sm:$0xff]
      %v446 = vld [vmem:[%s444 + $0x8] sm:$0xff]
      %v447 = vld [vmem:[%s444 + $0x10] sm:$0xff]
      %451 = vrot.lane.b32.xlu0 %v445, 127
      %v452 = vpop.permute.xlu0 %451
      %453 = vrot.lane.b32.xlu0 %v446, 127
      %v454 = vpop.permute.xlu0 %453
      %455 = vrot.lane.b32.xlu0 %v447, 127
      %v456 = vpop.permute.xlu0 %455
      %vm457 = vcmask 1039360
      %v458 = vsel %vm457, %v452, %v454
      %v459 = vsel %vm457, %v454, %v456
      %462 = vrot.lane.b32.xlu0 %v445, 126
      %v463 = vpop.permute.xlu0 %462
      %464 = vrot.lane.b32.xlu0 %v446, 126
      %v465 = vpop.permute.xlu0 %464
      %466 = vrot.lane.b32.xlu0 %v447, 126
      %v467 = vpop.permute.xlu0 %466
      %vm468 = vcmask 1031168
      %v469 = vsel %vm468, %v463, %v465
      %v470 = vsel %vm468, %v465, %v467
      %473 = vrot.lane.b32.xlu0 %v445, 125
      %v474 = vpop.permute.xlu0 %473
      %475 = vrot.lane.b32.xlu0 %v446, 125
      %v476 = vpop.permute.xlu0 %475
      %477 = vrot.lane.b32.xlu0 %v447, 125
      %v478 = vpop.permute.xlu0 %477
      %vm479 = vcmask 1022976
      %v480 = vsel %vm479, %v474, %v476
      %v481 = vsel %vm479, %v476, %v478
      %484 = vrot.lane.b32.xlu0 %v445, 124
      %v485 = vpop.permute.xlu0 %484
      %486 = vrot.lane.b32.xlu0 %v446, 124
      %v487 = vpop.permute.xlu0 %486
      %488 = vrot.lane.b32.xlu0 %v447, 124
      %v489 = vpop.permute.xlu0 %488
      %vm490 = vcmask 1014784
      %v491 = vsel %vm490, %v485, %v487
      %v492 = vsel %vm490, %v487, %v489
      %495 = vrot.lane.b32.xlu0 %v445, 123
      %v496 = vpop.permute.xlu0 %495
      %497 = vrot.lane.b32.xlu0 %v446, 123
      %v498 = vpop.permute.xlu0 %497
      %499 = vrot.lane.b32.xlu0 %v447, 123
      %v500 = vpop.permute.xlu0 %499
      %vm501 = vcmask 1006592
      %v502 = vsel %vm501, %v496, %v498
      %v503 = vsel %vm501, %v498, %v500
      %506 = vrot.lane.b32.xlu0 %v445, 122
      %v507 = vpop.permute.xlu0 %506
      %508 = vrot.lane.b32.xlu0 %v446, 122
      %v509 = vpop.permute.xlu0 %508
      %510 = vrot.lane.b32.xlu0 %v447, 122
      %v511 = vpop.permute.xlu0 %510
      %vm512 = vcmask 998400
      %v513 = vsel %vm512, %v507, %v509
      %v514 = vsel %vm512, %v509, %v511
      %517 = vrot.lane.b32.xlu0 %v445, 121
      %v518 = vpop.permute.xlu0 %517
      %519 = vrot.lane.b32.xlu0 %v446, 121
      %v520 = vpop.permute.xlu0 %519
      %521 = vrot.lane.b32.xlu0 %v447, 121
      %v522 = vpop.permute.xlu0 %521
      %vm523 = vcmask 990208
      %v524 = vsel %vm523, %v518, %v520
      %v525 = vsel %vm523, %v520, %v522
      %528 = vrot.lane.b32.xlu0 %v445, 120
      %v529 = vpop.permute.xlu0 %528
      %530 = vrot.lane.b32.xlu0 %v446, 120
      %v531 = vpop.permute.xlu0 %530
      %532 = vrot.lane.b32.xlu0 %v447, 120
      %v533 = vpop.permute.xlu0 %532
      %vm534 = vcmask 982016
      %v535 = vsel %vm534, %v529, %v531
      %v536 = vsel %vm534, %v531, %v533
      %539 = vrot.lane.b32.xlu0 %v445, 119
      %v540 = vpop.permute.xlu0 %539
      %541 = vrot.lane.b32.xlu0 %v446, 119
      %v542 = vpop.permute.xlu0 %541
      %543 = vrot.lane.b32.xlu0 %v447, 119
      %v544 = vpop.permute.xlu0 %543
      %vm545 = vcmask 973824
      %v546 = vsel %vm545, %v540, %v542
      %v547 = vsel %vm545, %v542, %v544
      %550 = vrot.lane.b32.xlu0 %v445, 118
      %v551 = vpop.permute.xlu0 %550
      %552 = vrot.lane.b32.xlu0 %v446, 118
      %v553 = vpop.permute.xlu0 %552
      %554 = vrot.lane.b32.xlu0 %v447, 118
      %v555 = vpop.permute.xlu0 %554
      %vm556 = vcmask 965632
      %v557 = vsel %vm556, %v551, %v553
      %v558 = vsel %vm556, %v553, %v555
      %561 = vrot.lane.b32.xlu0 %v445, 117
      %v562 = vpop.permute.xlu0 %561
      %563 = vrot.lane.b32.xlu0 %v446, 117
      %v564 = vpop.permute.xlu0 %563
      %565 = vrot.lane.b32.xlu0 %v447, 117
      %v566 = vpop.permute.xlu0 %565
      %vm567 = vcmask 957440
      %v568 = vsel %vm567, %v562, %v564
      %v569 = vsel %vm567, %v564, %v566
      %572 = vrot.lane.b32.xlu0 %v445, 116
      %v573 = vpop.permute.xlu0 %572
      %574 = vrot.lane.b32.xlu0 %v446, 116
      %v575 = vpop.permute.xlu0 %574
      %576 = vrot.lane.b32.xlu0 %v447, 116
      %v577 = vpop.permute.xlu0 %576
      %vm578 = vcmask 949248
      %v579 = vsel %vm578, %v573, %v575
      %v580 = vsel %vm578, %v575, %v577
      %583 = vrot.lane.b32.xlu0 %v445, 115
      %v584 = vpop.permute.xlu0 %583
      %585 = vrot.lane.b32.xlu0 %v446, 115
      %v586 = vpop.permute.xlu0 %585
      %587 = vrot.lane.b32.xlu0 %v447, 115
      %v588 = vpop.permute.xlu0 %587
      %vm589 = vcmask 941056
      %v590 = vsel %vm589, %v584, %v586
      %v591 = vsel %vm589, %v586, %v588
      %594 = vrot.lane.b32.xlu0 %v445, 114
      %v595 = vpop.permute.xlu0 %594
      %596 = vrot.lane.b32.xlu0 %v446, 114
      %v597 = vpop.permute.xlu0 %596
      %598 = vrot.lane.b32.xlu0 %v447, 114
      %v599 = vpop.permute.xlu0 %598
      %vm600 = vcmask 932864
      %v601 = vsel %vm600, %v595, %v597
      %v602 = vsel %vm600, %v597, %v599
      %605 = vrot.lane.b32.xlu0 %v445, 113
      %v606 = vpop.permute.xlu0 %605
      %607 = vrot.lane.b32.xlu0 %v446, 113
      %v608 = vpop.permute.xlu0 %607
      %609 = vrot.lane.b32.xlu0 %v447, 113
      %v610 = vpop.permute.xlu0 %609
      %vm611 = vcmask 924672
      %v612 = vsel %vm611, %v606, %v608
      %v613 = vsel %vm611, %v608, %v610
      %616 = vrot.lane.b32.xlu0 %v445, 112
      %v617 = vpop.permute.xlu0 %616
      %618 = vrot.lane.b32.xlu0 %v446, 112
      %v619 = vpop.permute.xlu0 %618
      %620 = vrot.lane.b32.xlu0 %v447, 112
      %v621 = vpop.permute.xlu0 %620
      %622 = vrot.lane.b32.xlu0 %v458, 112
      %v623 = vpop.permute.xlu0 %622
      %624 = vrot.lane.b32.xlu0 %v459, 112
      %v625 = vpop.permute.xlu0 %624
      %626 = vrot.lane.b32.xlu0 %v456, 112
      %v627 = vpop.permute.xlu0 %626
      %628 = vrot.lane.b32.xlu0 %v469, 112
      %v629 = vpop.permute.xlu0 %628
      %630 = vrot.lane.b32.xlu0 %v470, 112
      %v631 = vpop.permute.xlu0 %630
      %632 = vrot.lane.b32.xlu0 %v467, 112
      %v633 = vpop.permute.xlu0 %632
      %634 = vrot.lane.b32.xlu0 %v480, 112
      %v635 = vpop.permute.xlu0 %634
      %636 = vrot.lane.b32.xlu0 %v481, 112
      %v637 = vpop.permute.xlu0 %636
      %638 = vrot.lane.b32.xlu0 %v478, 112
      %v639 = vpop.permute.xlu0 %638
      %640 = vrot.lane.b32.xlu0 %v491, 112
      %v641 = vpop.permute.xlu0 %640
      %642 = vrot.lane.b32.xlu0 %v492, 112
      %v643 = vpop.permute.xlu0 %642
      %644 = vrot.lane.b32.xlu0 %v489, 112
      %v645 = vpop.permute.xlu0 %644
      %646 = vrot.lane.b32.xlu0 %v502, 112
      %v647 = vpop.permute.xlu0 %646
      %648 = vrot.lane.b32.xlu0 %v503, 112
      %v649 = vpop.permute.xlu0 %648
      %650 = vrot.lane.b32.xlu0 %v500, 112
      %v651 = vpop.permute.xlu0 %650
      %652 = vrot.lane.b32.xlu0 %v513, 112
      %v653 = vpop.permute.xlu0 %652
      %654 = vrot.lane.b32.xlu0 %v514, 112
      %v655 = vpop.permute.xlu0 %654
      %656 = vrot.lane.b32.xlu0 %v511, 112
      %v657 = vpop.permute.xlu0 %656
      %658 = vrot.lane.b32.xlu0 %v524, 112
      %v659 = vpop.permute.xlu0 %658
      %660 = vrot.lane.b32.xlu0 %v525, 112
      %v661 = vpop.permute.xlu0 %660
      %662 = vrot.lane.b32.xlu0 %v522, 112
      %v663 = vpop.permute.xlu0 %662
      %664 = vrot.lane.b32.xlu0 %v535, 112
      %v665 = vpop.permute.xlu0 %664
      %666 = vrot.lane.b32.xlu0 %v536, 112
      %v667 = vpop.permute.xlu0 %666
      %668 = vrot.lane.b32.xlu0 %v533, 112
      %v669 = vpop.permute.xlu0 %668
      %670 = vrot.lane.b32.xlu0 %v546, 112
      %v671 = vpop.permute.xlu0 %670
      %672 = vrot.lane.b32.xlu0 %v547, 112
      %v673 = vpop.permute.xlu0 %672
      %674 = vrot.lane.b32.xlu0 %v544, 112
      %v675 = vpop.permute.xlu0 %674
      %676 = vrot.lane.b32.xlu0 %v557, 112
      %v677 = vpop.permute.xlu0 %676
      %678 = vrot.lane.b32.xlu0 %v558, 112
      %v679 = vpop.permute.xlu0 %678
      %680 = vrot.lane.b32.xlu0 %v555, 112
      %v681 = vpop.permute.xlu0 %680
      %682 = vrot.lane.b32.xlu0 %v568, 112
      %v683 = vpop.permute.xlu0 %682
      %684 = vrot.lane.b32.xlu0 %v569, 112
      %v685 = vpop.permute.xlu0 %684
      %686 = vrot.lane.b32.xlu0 %v566, 112
      %v687 = vpop.permute.xlu0 %686
      %688 = vrot.lane.b32.xlu0 %v579, 112
      %v689 = vpop.permute.xlu0 %688
      %690 = vrot.lane.b32.xlu0 %v580, 112
      %v691 = vpop.permute.xlu0 %690
      %692 = vrot.lane.b32.xlu0 %v577, 112
      %v693 = vpop.permute.xlu0 %692
      %694 = vrot.lane.b32.xlu0 %v590, 112
      %v695 = vpop.permute.xlu0 %694
      %696 = vrot.lane.b32.xlu0 %v591, 112
      %v697 = vpop.permute.xlu0 %696
      %698 = vrot.lane.b32.xlu0 %v588, 112
      %v699 = vpop.permute.xlu0 %698
      %700 = vrot.lane.b32.xlu0 %v601, 112
      %v701 = vpop.permute.xlu0 %700
      %702 = vrot.lane.b32.xlu0 %v602, 112
      %v703 = vpop.permute.xlu0 %702
      %704 = vrot.lane.b32.xlu0 %v599, 112
      %v705 = vpop.permute.xlu0 %704
      %706 = vrot.lane.b32.xlu0 %v612, 112
      %v707 = vpop.permute.xlu0 %706
      %708 = vrot.lane.b32.xlu0 %v613, 112
      %v709 = vpop.permute.xlu0 %708
      %710 = vrot.lane.b32.xlu0 %v610, 112
      %v711 = vpop.permute.xlu0 %710
      %vm712 = vcmask 916480
      %v713 = vsel %vm712, %v617, %v619
      %v714 = vsel %vm712, %v619, %v621
      %v715 = vsel %vm712, %v623, %v625
      %v716 = vsel %vm712, %v625, %v627
      %v717 = vsel %vm712, %v629, %v631
      %v718 = vsel %vm712, %v631, %v633
      %v719 = vsel %vm712, %v635, %v637
      %v720 = vsel %vm712, %v637, %v639
      %v721 = vsel %vm712, %v641, %v643
      %v722 = vsel %vm712, %v643, %v645
      %v723 = vsel %vm712, %v647, %v649
      %v724 = vsel %vm712, %v649, %v651
      %v725 = vsel %vm712, %v653, %v655
      %v726 = vsel %vm712, %v655, %v657
      %v727 = vsel %vm712, %v659, %v661
      %v728 = vsel %vm712, %v661, %v663
      %v729 = vsel %vm712, %v665, %v667
      %v730 = vsel %vm712, %v667, %v669
      %v731 = vsel %vm712, %v671, %v673
      %v732 = vsel %vm712, %v673, %v675
      %v733 = vsel %vm712, %v677, %v679
      %v734 = vsel %vm712, %v679, %v681
      %v735 = vsel %vm712, %v683, %v685
      %v736 = vsel %vm712, %v685, %v687
      %v737 = vsel %vm712, %v689, %v691
      %v738 = vsel %vm712, %v691, %v693
      %v739 = vsel %vm712, %v695, %v697
      %v740 = vsel %vm712, %v697, %v699
      %v741 = vsel %vm712, %v701, %v703
      %v742 = vsel %vm712, %v703, %v705
      %v743 = vsel %vm712, %v707, %v709
      %v744 = vsel %vm712, %v709, %v711
      %777 = vrot.lane.b32.xlu0 %v445, 96
      %v778 = vpop.permute.xlu0 %777
      %779 = vrot.lane.b32.xlu0 %v446, 96
      %v780 = vpop.permute.xlu0 %779
      %781 = vrot.lane.b32.xlu0 %v447, 96
      %v782 = vpop.permute.xlu0 %781
      %783 = vrot.lane.b32.xlu0 %v458, 96
      %v784 = vpop.permute.xlu0 %783
      %785 = vrot.lane.b32.xlu0 %v459, 96
      %v786 = vpop.permute.xlu0 %785
      %787 = vrot.lane.b32.xlu0 %v456, 96
      %v788 = vpop.permute.xlu0 %787
      %789 = vrot.lane.b32.xlu0 %v469, 96
      %v790 = vpop.permute.xlu0 %789
      %791 = vrot.lane.b32.xlu0 %v470, 96
      %v792 = vpop.permute.xlu0 %791
      %793 = vrot.lane.b32.xlu0 %v467, 96
      %v794 = vpop.permute.xlu0 %793
      %795 = vrot.lane.b32.xlu0 %v480, 96
      %v796 = vpop.permute.xlu0 %795
      %797 = vrot.lane.b32.xlu0 %v481, 96
      %v798 = vpop.permute.xlu0 %797
      %799 = vrot.lane.b32.xlu0 %v478, 96
      %v800 = vpop.permute.xlu0 %799
      %801 = vrot.lane.b32.xlu0 %v491, 96
      %v802 = vpop.permute.xlu0 %801
      %803 = vrot.lane.b32.xlu0 %v492, 96
      %v804 = vpop.permute.xlu0 %803
      %805 = vrot.lane.b32.xlu0 %v489, 96
      %v806 = vpop.permute.xlu0 %805
      %807 = vrot.lane.b32.xlu0 %v502, 96
      %v808 = vpop.permute.xlu0 %807
      %809 = vrot.lane.b32.xlu0 %v503, 96
      %v810 = vpop.permute.xlu0 %809
      %811 = vrot.lane.b32.xlu0 %v500, 96
      %v812 = vpop.permute.xlu0 %811
      %813 = vrot.lane.b32.xlu0 %v513, 96
      %v814 = vpop.permute.xlu0 %813
      %815 = vrot.lane.b32.xlu0 %v514, 96
      %v816 = vpop.permute.xlu0 %815
      %817 = vrot.lane.b32.xlu0 %v511, 96
      %v818 = vpop.permute.xlu0 %817
      %vm819 = vcmask 785408
      %v820 = vsel %vm819, %v778, %v780
      %v821 = vsel %vm819, %v780, %v782
      %v822 = vsel %vm819, %v784, %v786
      %v823 = vsel %vm819, %v786, %v788
      %v824 = vsel %vm819, %v790, %v792
      %v825 = vsel %vm819, %v792, %v794
      %v826 = vsel %vm819, %v796, %v798
      %v827 = vsel %vm819, %v798, %v800
      %v828 = vsel %vm819, %v802, %v804
      %v829 = vsel %vm819, %v804, %v806
      %v830 = vsel %vm819, %v808, %v810
      %v831 = vsel %vm819, %v810, %v812
      %v832 = vsel %vm819, %v814, %v816
      %v833 = vsel %vm819, %v816, %v818
      %v848 = vld [vmem:[%s4] sm:$0xff]
      %v849 = vld [vmem:[%s4 + $0x8] sm:$0xff]
      %v850 = vld [vmem:[%s4 + $0x10] sm:$0xff]
      %v851 = vld [vmem:[%s4 + $0x18] sm:$0xff]
      %v852 = vld [vmem:[%s4 + $0x20] sm:$0xff]
      %v853 = vld [vmem:[%s4 + $0x28] sm:$0xff]
      %v854 = vld [vmem:[%s4 + $0x30] sm:$0xff]
      %v855 = vld [vmem:[%s4 + $0x38] sm:$0xff]
      %v856 = vld [vmem:[%s4 + $0x40] sm:$0xff]
      %v857 = vld [vmem:[%s4 + $0x48] sm:$0xff]
      %v858 = vld [vmem:[%s4 + $0x50] sm:$0xff]
      %v859 = vld [vmem:[%s4 + $0x58] sm:$0xff]
      %vm860 = vcmask 457728
      %v862 = vsel %vm860, %v850, 0
      %v865 = vsel %vm860, %v853, 0
      %v868 = vsel %vm860, %v856, 0
      %v871 = vsel %vm860, %v859, 0
      %873 = vmatpush.msra.mxu0 %v612
      %874 = vmatpush.msra.mxu0 %v601
      %875 = vmatpush.msra.mxu0 %v590
      %876 = vmatpush.msra.mxu0 %v579
      %877 = vmatpush.msra.mxu0 %v568
      %878 = vmatpush.msra.mxu0 %v557
      %879 = vmatpush.msra.mxu0 %v546
      %880 = vmatpush.msra.mxu0 %v535
      %881 = vmatpush.msra.mxu0 %v524
      %882 = vmatpush.msra.mxu0 %v513
      %883 = vmatpush.msra.mxu0 %v502
      %884 = vmatpush.msra.mxu0 %v491
      %885 = vmatpush.msra.mxu0 %v480
      %886 = vmatpush.msra.mxu0 %v469
      %887 = vmatpush.msra.mxu0 %v458
      %888 = vmatpush.msra.mxu0 %v445
      %889 = vmatmul.f32.gmra.mxu0 %v848
      %v890 = vpop.f32.mrf.mxu0
      %v891 = vadd.f32 0.0, %v890
      %892 = vmatmul.f32.gmra.mxu0 %v851
      %v893 = vpop.f32.mrf.mxu0
      %v894 = vadd.f32 0.0, %v893
      %895 = vmatmul.f32.gmra.mxu0 %v854
      %v896 = vpop.f32.mrf.mxu0
      %v897 = vadd.f32 0.0, %v896
      %898 = vmatmul.f32.gmra.mxu0 %v857
      %v899 = vpop.f32.mrf.mxu0
      %v900 = vadd.f32 0.0, %v899
      %901 = vdwg.mxu0
      %902 = vmatpush.msra.mxu0 %v743
      %903 = vmatpush.msra.mxu0 %v741
      %904 = vmatpush.msra.mxu0 %v739
      %905 = vmatpush.msra.mxu0 %v737
      %906 = vmatpush.msra.mxu0 %v735
      %907 = vmatpush.msra.mxu0 %v733
      %908 = vmatpush.msra.mxu0 %v731
      %909 = vmatpush.msra.mxu0 %v729
      %910 = vmatpush.msra.mxu0 %v727
      %911 = vmatpush.msra.mxu0 %v725
      %912 = vmatpush.msra.mxu0 %v723
      %913 = vmatpush.msra.mxu0 %v721
      %914 = vmatpush.msra.mxu0 %v719
      %915 = vmatpush.msra.mxu0 %v717
      %916 = vmatpush.msra.mxu0 %v715
      %917 = vmatpush.msra.mxu0 %v713
      %918 = vmatmul.f32.gmra.mxu0 %v849
      %v919 = vpop.f32.mrf.mxu0
      %v920 = vadd.f32 %v891, %v919
      %921 = vmatmul.f32.gmra.mxu0 %v852
      %v922 = vpop.f32.mrf.mxu0
      %v923 = vadd.f32 %v894, %v922
      %924 = vmatmul.f32.gmra.mxu0 %v855
      %v925 = vpop.f32.mrf.mxu0
      %v926 = vadd.f32 %v897, %v925
      %927 = vmatmul.f32.gmra.mxu0 %v858
      %v928 = vpop.f32.mrf.mxu0
      %v929 = vadd.f32 %v900, %v928
      %930 = vdwg.mxu0
      %931 = vmatpush.msra.mxu0 0.0
      %932 = vmatpush.msra.mxu0 0.0
      %933 = vmatpush.msra.mxu0 0.0
      %934 = vmatpush.msra.mxu0 0.0
      %935 = vmatpush.msra.mxu0 0.0
      %936 = vmatpush.msra.mxu0 0.0
      %937 = vmatpush.msra.mxu0 0.0
      %938 = vmatpush.msra.mxu0 0.0
      %939 = vmatpush.msra.mxu0 0.0
      %940 = vmatpush.msra.mxu0 %v832
      %941 = vmatpush.msra.mxu0 %v830
      %942 = vmatpush.msra.mxu0 %v828
      %943 = vmatpush.msra.mxu0 %v826
      %944 = vmatpush.msra.mxu0 %v824
      %945 = vmatpush.msra.mxu0 %v822
      %946 = vmatpush.msra.mxu0 %v820
      %947 = vmatmul.f32.gmra.mxu0 %v862
      %v948 = vpop.f32.mrf.mxu0
      %v949 = vadd.f32 %v920, %v948
      %950 = vmatmul.f32.gmra.mxu0 %v865
      %v951 = vpop.f32.mrf.mxu0
      %v952 = vadd.f32 %v923, %v951
      %953 = vmatmul.f32.gmra.mxu0 %v868
      %v954 = vpop.f32.mrf.mxu0
      %v955 = vadd.f32 %v926, %v954
      %956 = vmatmul.f32.gmra.mxu0 %v871
      %v957 = vpop.f32.mrf.mxu0
      %v958 = vadd.f32 %v929, %v957
      %959 = vdwg.mxu0
      %960 = vmatpush.msra.mxu0 %v613
      %961 = vmatpush.msra.mxu0 %v602
      %962 = vmatpush.msra.mxu0 %v591
      %963 = vmatpush.msra.mxu0 %v580
      %964 = vmatpush.msra.mxu0 %v569
      %965 = vmatpush.msra.mxu0 %v558
      %966 = vmatpush.msra.mxu0 %v547
      %967 = vmatpush.msra.mxu0 %v536
      %968 = vmatpush.msra.mxu0 %v525
      %969 = vmatpush.msra.mxu0 %v514
      %970 = vmatpush.msra.mxu0 %v503
      %971 = vmatpush.msra.mxu0 %v492
      %972 = vmatpush.msra.mxu0 %v481
      %973 = vmatpush.msra.mxu0 %v470
      %974 = vmatpush.msra.mxu0 %v459
      %975 = vmatpush.msra.mxu0 %v446
      %976 = vmatmul.f32.gmra.mxu0 %v848
      %v977 = vpop.f32.mrf.mxu0
      %v978 = vadd.f32 0.0, %v977
      %979 = vmatmul.f32.gmra.mxu0 %v851
      %v980 = vpop.f32.mrf.mxu0
      %v981 = vadd.f32 0.0, %v980
      %982 = vmatmul.f32.gmra.mxu0 %v854
      %v983 = vpop.f32.mrf.mxu0
      %v984 = vadd.f32 0.0, %v983
      %985 = vmatmul.f32.gmra.mxu0 %v857
      %v986 = vpop.f32.mrf.mxu0
      %v987 = vadd.f32 0.0, %v986
      %988 = vdwg.mxu0
      %989 = vmatpush.msra.mxu0 %v744
      %990 = vmatpush.msra.mxu0 %v742
      %991 = vmatpush.msra.mxu0 %v740
      %992 = vmatpush.msra.mxu0 %v738
      %993 = vmatpush.msra.mxu0 %v736
      %994 = vmatpush.msra.mxu0 %v734
      %995 = vmatpush.msra.mxu0 %v732
      %996 = vmatpush.msra.mxu0 %v730
      %997 = vmatpush.msra.mxu0 %v728
      %998 = vmatpush.msra.mxu0 %v726
      %999 = vmatpush.msra.mxu0 %v724
      %1000 = vmatpush.msra.mxu0 %v722
      %1001 = vmatpush.msra.mxu0 %v720
      %1002 = vmatpush.msra.mxu0 %v718
      %1003 = vmatpush.msra.mxu0 %v716
      %1004 = vmatpush.msra.mxu0 %v714
      %1005 = vmatmul.f32.gmra.mxu0 %v849
      %v1006 = vpop.f32.mrf.mxu0
      %v1007 = vadd.f32 %v978, %v1006
      %1008 = vmatmul.f32.gmra.mxu0 %v852
      %v1009 = vpop.f32.mrf.mxu0
      %v1010 = vadd.f32 %v981, %v1009
      %1011 = vmatmul.f32.gmra.mxu0 %v855
      %v1012 = vpop.f32.mrf.mxu0
      %v1013 = vadd.f32 %v984, %v1012
      %1014 = vmatmul.f32.gmra.mxu0 %v858
      %v1015 = vpop.f32.mrf.mxu0
      %v1016 = vadd.f32 %v987, %v1015
      %1017 = vdwg.mxu0
      %1018 = vmatpush.msra.mxu0 0.0
      %1019 = vmatpush.msra.mxu0 0.0
      %1020 = vmatpush.msra.mxu0 0.0
      %1021 = vmatpush.msra.mxu0 0.0
      %1022 = vmatpush.msra.mxu0 0.0
      %1023 = vmatpush.msra.mxu0 0.0
      %1024 = vmatpush.msra.mxu0 0.0
      %1025 = vmatpush.msra.mxu0 0.0
      %1026 = vmatpush.msra.mxu0 0.0
      %1027 = vmatpush.msra.mxu0 %v833
      %1028 = vmatpush.msra.mxu0 %v831
      %1029 = vmatpush.msra.mxu0 %v829
      %1030 = vmatpush.msra.mxu0 %v827
      %1031 = vmatpush.msra.mxu0 %v825
      %1032 = vmatpush.msra.mxu0 %v823
      %1033 = vmatpush.msra.mxu0 %v821
      %1034 = vmatmul.f32.gmra.mxu0 %v862
      %v1035 = vpop.f32.mrf.mxu0
      %v1036 = vadd.f32 %v1007, %v1035
      %1037 = vmatmul.f32.gmra.mxu0 %v865
      %v1038 = vpop.f32.mrf.mxu0
      %v1039 = vadd.f32 %v1010, %v1038
      %1040 = vmatmul.f32.gmra.mxu0 %v868
      %v1041 = vpop.f32.mrf.mxu0
      %v1042 = vadd.f32 %v1013, %v1041
      %1043 = vmatmul.f32.gmra.mxu0 %v871
      %v1044 = vpop.f32.mrf.mxu0
      %v1045 = vadd.f32 %v1016, %v1044
      %1046 = vdwg.mxu0
      %v1047 = vld [vmem:[%s408] sm:$0xff]
      %v1048 = vld [vmem:[%s408 + $0x8] sm:$0xff]
      %v1049 = vld [vmem:[%s395] sm:$0xff]
      %1050 = vrot.lane.b32.xlu0 %v1049, 1
      %v1051 = vpop.permute.xlu0 %1050
      %1052 = vrot.lane.b32.xlu0 %v1047, 1
      %v1053 = vpop.permute.xlu0 %1052
      %1054 = vrot.lane.b32.xlu0 %v1048, 1
      %v1055 = vpop.permute.xlu0 %1054
      %vm1056 = vcmask 7168
      %v1057 = vsel %vm1056, %v1053, %v1055
      %v1058 = vsel %vm1056, %v1051, %v1053
      %v1059 = vld [vmem:[%s421] sm:$0xff]
      %1060 = vrot.lane.b32.xlu0 %v1047, 127
      %v1061 = vpop.permute.xlu0 %1060
      %1062 = vrot.lane.b32.xlu0 %v1048, 127
      %v1063 = vpop.permute.xlu0 %1062
      %v1064 = vsel %vm457, %v1061, %v1063
      %1065 = vrot.lane.b32.xlu0 %v1059, 127
      %v1066 = vpop.permute.xlu0 %1065
      %v1067 = vsel %vm457, %v1063, %v1066
      %v1068 = vlaneseq
      %v1069 = vand.u32 %v1068, 127
      %v1070 = vadd.s32 %v1069, 128
      %v1071 = vstv %s440
      %v1072 = vadd.s32 %v1071, %v1069
      %v1073 = vadd.s32 %v1071, %v1070
      %vm1074 = vcmp.eq.s32.totalorder %v1064, %v1072
      %vm1075 = vcmp.eq.s32.totalorder %v1067, %v1073
      %vm1076 = vcmp.lt.s32.totalorder %v1072, 255
      %vm1077 = vcmp.lt.s32.totalorder %v1073, 255
      %vm1078 = vmand %vm1074, %vm1076
      %vm1079 = vmand %vm1075, %vm1077
      %vm1080 = vcmp.eq.s32.totalorder %v1047, %v1072
      %vm1081 = vcmp.eq.s32.totalorder %v1048, %v1073
      %vm1082 = vcmp.eq.s32.totalorder %v1058, %v1072
      %vm1083 = vcmp.eq.s32.totalorder %v1057, %v1073
      %vm1084 = vcmp.gt.s32.totalorder %v1072, 0
      %vm1085 = vcmp.gt.s32.totalorder %v1073, 0
      %vm1086 = vmand %vm1082, %vm1084
      %vm1087 = vmand %vm1083, %vm1085
      %v1088 = vsel %vm1086, %v952, 0.0
      %v1089 = vsel %vm1087, %v1039, 0.0
      %v1090 = vsel %vm1080, %v955, %v1088
      %v1091 = vsel %vm1081, %v1042, %v1089
      %v1092 = vsel %vm1078, %v958, %v1090
      %v1093 = vsel %vm1079, %v1045, %v1091
      %v1094 = vadd.f32 %v949, %v1092
      %v1095 = vadd.f32 %v1036, %v1093
      %v1096 = vpack.c.bf16 %v1095, %v1094
      %1097 = vst [vmem:[%s434] sm:$0xff] %v1096
      %p1098 = scmp.eq.s32.totalorder %s23, 0
      // Predicated region
      $region41: #{inception_module_transpose.2} parent=39 // pred_check
        %p1099 = pneg %p1098
      $region42: #{inception_module_transpose.2} parent=39 // pred_check_branch
        %1101 = sbr.rel (%p1099) target = $region44
      $region43: #{inception_module_transpose.2} parent=39 // pred_region
        %vm1102 = vcmask 15360
        %1103 = vst.msk [vmem:[%s439] sm:$0xff] %vm1102, 0.0
      $region44: #{inception_module_transpose.2} parent=39 // pred_fallthru
        _
      %v1104 = vld [vmem:[%s439] sm:$0xff]
      %v1105 = vadd.f32 %v1094, %v1095
      %1106 = vadd.xlane.f32.xlu0 %v1105
      %v1107 = vpop.xlane.xlu0 %1106
      %v1108 = vmul.f32 %v1094, %v1094
      %v1109 = vmul.f32 %v1095, %v1095
      %v1110 = vadd.f32 %v1108, %v1109
      %1111 = vadd.xlane.f32.xlu0 %v1110
      %v1112 = vpop.xlane.xlu0 %1111
      %v1113 = vsel %vm1056, %v1107, %v1112
      %v1114 = vadd.f32 %v1104, %v1113
      %vm1115 = vcmask 15360
      %1116 = vst.msk [vmem:[%s439] sm:$0xff] %vm1115, %v1114
      %s1117 = smul.u32 2, %s23
      %p1118 = scmp.lt.s32.totalorder %s22, 1
      %s1119 = scalar_select %p1118, %s22, 1
      %p1120 = scmp.lt.s32.totalorder %s1117, 1
      %s1121 = scalar_select %p1120, %s1117, 1
      %s1122 = smul.addr %s1119, 2
      %s1123 = sadd.s32 %s1121, %s1122
      %s1124 = smul.addr %s1123, 4
      %s1125 = scalar_lea.vmem %s5, %s1124
      %p1126 = scmp.lt.s32.totalorder %s22, 1
      %s1127 = scalar_select %p1126, %s22, 1
      %s1128 = smul.addr %s1127, 8
      %s1129 = scalar_lea.vmem %s6, %s1128
      // Predicated region
      $region45: #{inception_module_transpose.2} parent=39 // pred_check
        %p1130 = pneg %p197
      $region46: #{inception_module_transpose.2} parent=39 // pred_check_branch
        %1132 = sbr.rel (%p1130) target = $region48
      $region47: #{inception_module_transpose.2} parent=39 // pred_region
        %s1133 = smul.u32 2, %s23
      $region48: #{inception_module_transpose.2} parent=39 // pred_fallthru
        _
      // Predicated region
      $region49: #{inception_module_transpose.2} parent=39 // pred_check
        %p1134 = pneg %p223
      $region50: #{inception_module_transpose.2} parent=39 // pred_check_branch
        %1136 = sbr.rel (%p1134) target = $region52
      $region51: #{inception_module_transpose.2} parent=39 // pred_region
        _
      $region52: #{inception_module_transpose.2} parent=39 // pred_fallthru
        _
    $region40: #{inception_module_transpose.2} parent=5 // pred_fallthru
      _
    %p1137 = scmp.le.s32.totalorder 2, %s13
    // Predicated region
    $region53: #{inception_module_transpose.2} parent=5 // pred_check
      %p1138 = pneg %p1137
    $region54: #{inception_module_transpose.2} parent=5 // pred_check_branch
      %1140 = sbr.rel (%p1138) target = $region56
    $region55: #{inception_module_transpose.2} parent=5 // pred_region
      %s1141 = ssub.s32 %s13, 2
      // Predicated region
      $region57: #{inception_module_transpose.2} parent=55 // pred_check
        %p1142 = pneg %p203
      $region58: #{inception_module_transpose.2} parent=55 // pred_check_branch
        %1144 = sbr.rel (%p1142) target = $region60
      $region59: #{inception_module_transpose.2} parent=55 // pred_region
        %s1145 = smul.u32 2, %s25
        %p1146 = scmp.lt.s32.totalorder %s24, 1
        %s1147 = scalar_select %p1146, %s24, 1
        %p1148 = scmp.lt.s32.totalorder %s1145, 1
        %s1149 = scalar_select %p1148, %s1145, 1
        %s1150 = smul.addr %s1147, 2
        %s1151 = sadd.s32 %s1149, %s1150
        %s1152 = smul.addr %s1151, 4
        %s1153 = scalar_lea.vmem %s5, %s1152
      $region60: #{inception_module_transpose.2} parent=55 // pred_fallthru
        _
      // Predicated region
      $region61: #{inception_module_transpose.2} parent=55 // pred_check
        %p1154 = pneg %p229
      $region62: #{inception_module_transpose.2} parent=55 // pred_check_branch
        %1156 = sbr.rel (%p1154) target = $region64
      $region63: #{inception_module_transpose.2} parent=55 // pred_region
        %p1157 = scmp.lt.s32.totalorder %s24, 1
        %s1158 = scalar_select %p1157, %s24, 1
        %s1159 = smul.addr %s1158, 8
        %s1160 = scalar_lea.vmem %s6, %s1159
      $region64: #{inception_module_transpose.2} parent=55 // pred_fallthru
        _
    $region56: #{inception_module_transpose.2} parent=5 // pred_fallthru
      _
  $region6: #{inception_module_transpose.2} parent=0 // loop_footer
    %s17 = sadd.s32 1, %s13
  $region7: #{inception_module_transpose.2} parent=0 // loop_footer_branch
    %12 = sbr.rel target = $region3
  $region8: #{inception_module_transpose.2} parent=0 // loop_exit
    _

</llo_original>
